<compile_context>
chip_gen: v6e
topology: v6e:2x2x1
jax: 0.10.0
libtpu: 0.0.40
codegen_flags: <defaults>
</compile_context>

<pallas_src>
import functools

import jax
import jax.numpy as jnp
import numpy as np
from jax import lax
from jax.experimental import pallas as pl
from jax.experimental.pallas import tpu as pltpu


def _round_up(x, m):
    return (x + m - 1) // m * m


def _num_tensorcores_per_chip():
    # Best-effort detection: only v7x has 2 TensorCores per chip.
    try:
        kind = jax.devices()[0].device_kind.lower()
    except Exception:
        return 1
    return 2 if ("v7" in kind or "7x" in kind) else 1


def _gru_kernel(x_ref, wih_ref, whh_ref, bfold_ref, bhhn_ref, out_ref,
                gi_ref, h_ref, *, seq_len, t_chunk, need_mask, unroll):
    """One (batch-split, time-chunk) grid step of the GRU.

    x_ref    : (T_c*Bc, Ip)     this chunk's time-major inputs (batch slice)
    wih_ref  : (Ip, 3*Hp)       W_ih^T, gate order [r, z, n], lane-padded/gate
    whh_ref  : (Hp, 3*Hp)       W_hh^T, same gate layout
    bfold_ref: (1, 3*Hp) f32    [b_ih_r+b_hh_r, b_ih_z+b_hh_z, b_ih_n]
    bhhn_ref : (1, Hp)   f32    b_hh_n (must stay inside r * (...))
    out_ref  : (Bc, Hp)  f32    final hidden state for this batch slice
    gi_ref   : (T_c*Bc, 3*Hp)   f32 scratch: chunk input projection
    h_ref    : (Bc, Hp)  f32    scratch: hidden state carried across chunks
    """
    c = pl.program_id(1)
    Bc, Hp = out_ref.shape

    @pl.when(c == 0)
    def _():
        h_ref[...] = jnp.zeros_like(h_ref)

    # ---- Phase 1: one lane-dense MXU matmul for ALL timesteps in this chunk.
    gi_ref[...] = (
        jnp.dot(x_ref[...], wih_ref[...], preferred_element_type=jnp.float32)
        + bfold_ref[...]
    )

    # ---- Loop-invariant hoists (JAX does not CSE broadcasts inside loops). ----
    whh = whh_ref[...]                                   # (Hp, 3Hp)
    bhh_n = jnp.broadcast_to(bhhn_ref[...], (Bc, Hp))    # (Bc, Hp) f32
    t_base = c * t_chunk

    # ---- Phase 2: serial time recurrence, h carried in registers. ----
    def step(t, h):
        off = pl.multiple_of(t * Bc, Bc)
        gi = gi_ref[pl.ds(off, Bc), :]                    # (Bc, 3Hp) f32
        gh = jnp.dot(h.astype(whh.dtype), whh,
                     preferred_element_type=jnp.float32)  # (Bc, 3Hp) f32
        r = jax.nn.sigmoid(gi[:, 0:Hp] + gh[:, 0:Hp])
        z = jax.nn.sigmoid(gi[:, Hp:2 * Hp] + gh[:, Hp:2 * Hp])
        n = jnp.tanh(gi[:, 2 * Hp:3 * Hp] + r * (gh[:, 2 * Hp:3 * Hp] + bhh_n))
        h_new = (1.0 - z) * n + z * h
        if need_mask:  # padded tail timesteps: keep h unchanged
            h_new = jnp.where(t_base + t < seq_len, h_new, h)
        return h_new

    h = lax.fori_loop(0, t_chunk, step, h_ref[...], unroll=unroll)
    h_ref[...] = h

    @pl.when(c == pl.num_programs(1) - 1)
    def _():
        out_ref[...] = h   # lane-dense (Bc, Hp) store — unmasked vst


def context_encoder_forward(x, w_ih, w_hh, b_ih, b_hh, *,
                            matmul_dtype=jnp.bfloat16):
    """x: (batch, seq_len, input_size) — PyTorch batch_first layout.

    w_ih: (3H, I), w_hh: (3H, H), b_ih: (3H,), b_hh: (3H,)  (PyTorch shapes,
    gate order [r, z, n]).  Returns (batch, hidden_size) in x.dtype.
    bf16 matmul operands are recommended on ALL generations (v5e/v6e/v7x);
    pass matmul_dtype=jnp.float32 for bit-tighter numerics.
    """
    B, S, I = x.shape
    H = w_hh.shape[1]

    if S == 0:  # empty sequence: GRU hidden state stays at zero-init.
        return jnp.zeros((B, H), x.dtype)

    Hp = _round_up(H, 128)   # lane-aligned gate blocks
    Ip = _round_up(I, 8)     # sublane-aligned input features

    n_split = 2 if (_num_tensorcores_per_chip() >= 2 and B > 8) else 1
    Bp = _round_up(B, 8 * n_split)
    Bc = Bp // n_split       # batch rows per core / grid slice

    # Time chunking: bound the gi scratch slab (<= ~8 MiB) and let the x
    # BlockSpec stream/double-buffer chunks from HBM while the recurrence runs.
    max_gi_bytes = 8 << 20
    t_cap = max(1, max_gi_bytes // (Bc * 3 * Hp * 4))
    T_c = int(min(S, 64, t_cap))
    n_chunks = -(-S // T_c)
    S_pad = n_chunks * T_c
    need_mask = S_pad != S

    step_tiles = (Bc // 8) * (Hp // 128)       # rough vreg pressure per step
    unroll = T_c if T_c <= 8 else (8 if step_tiles <= 4 else 4)

    f32 = jnp.float32
    w_ih = w_ih.astype(f32)
    w_hh = w_hh.astype(f32)
    b_ih = b_ih.astype(f32)
    b_hh = b_hh.astype(f32)

    # ---- Pack weights: transpose + per-gate lane padding -> (in_pad, 3*Hp). ----
    def pack_w(w, in_dim, in_pad):
        out = jnp.zeros((in_pad, 3 * Hp), f32)
        for g in range(3):
            out = out.at[:in_dim, g * Hp:g * Hp + H].set(w[g * H:(g + 1) * H, :].T)
        return out.astype(matmul_dtype)

    wih_p = pack_w(w_ih, I, Ip)      # (Ip, 3Hp)
    whh_p = pack_w(w_hh, H, Hp)      # (Hp, 3Hp)

    # ---- Fold biases: b_ih (+ b_hh for r,z) into the precomputed projection. ----
    bfold = jnp.zeros((1, 3 * Hp), f32)
    bfold = bfold.at[0, 0 * Hp:0 * Hp + H].set(b_ih[0:H] + b_hh[0:H])
    bfold = bfold.at[0, 1 * Hp:1 * Hp + H].set(b_ih[H:2 * H] + b_hh[H:2 * H])
    bfold = bfold.at[0, 2 * Hp:2 * Hp + H].set(b_ih[2 * H:3 * H])
    bhhn = jnp.zeros((1, Hp), f32).at[0, :H].set(b_hh[2 * H:3 * H])

    # ---- Time-major, padded, batch-split, flattened input (built directly in
    # matmul_dtype — layout plumbing only). Row order: [split][time][batch]. ----
    x_tm = jnp.transpose(x.astype(matmul_dtype), (1, 0, 2))           # (S, B, I)
    x_pad = jnp.zeros((S_pad, Bp, Ip), matmul_dtype).at[:S, :B, :I].set(x_tm)
    x_2d = (x_pad.reshape(S_pad, n_split, Bc, Ip)
                 .transpose(1, 0, 2, 3)
                 .reshape(n_split * S_pad * Bc, Ip))

    # ---- VMEM budget: gi slab + double-buffered x chunk + weights + h/out. ----
    msz = jnp.dtype(matmul_dtype).itemsize
    needed = (T_c * Bc * 3 * Hp * 4             # gi scratch (f32)
              + 2 * T_c * Bc * Ip * msz         # x chunk, double-buffered
              + 2 * (Ip + Hp) * 3 * Hp * msz    # weights
              + 2 * 8 * 4 * Hp * 4              # biases (sublane-padded)
              + 4 * Bc * Hp * 4)                # h scratch + out block
    vmem_limit = int(min(max(2 * needed + (4 << 20), 32 << 20), 64 << 20))

    kernel = functools.partial(_gru_kernel, seq_len=S, t_chunk=T_c,
                               need_mask=need_mask, unroll=unroll)

    grid_spec = pltpu.PrefetchScalarGridSpec(
        num_scalar_prefetch=0,
        grid=(n_split, n_chunks),
        in_specs=[
            pl.BlockSpec((T_c * Bc, Ip), lambda p, c: (p * n_chunks + c, 0)),
            pl.BlockSpec((Ip, 3 * Hp), lambda p, c: (0, 0)),
            pl.BlockSpec((Hp, 3 * Hp), lambda p, c: (0, 0)),
            pl.BlockSpec((1, 3 * Hp), lambda p, c: (0, 0)),
            pl.BlockSpec((1, Hp), lambda p, c: (0, 0)),
        ],
        out_specs=pl.BlockSpec((Bc, Hp), lambda p, c: (p, 0)),
        scratch_shapes=[
            pltpu.VMEM((T_c * Bc, 3 * Hp), jnp.float32),   # gi chunk
            pltpu.VMEM((Bc, Hp), jnp.float32),             # carried hidden h
        ],
    )

    out_p = pl.pallas_call(
        kernel,
        out_shape=jax.ShapeDtypeStruct((Bp, Hp), jnp.float32),
        grid_spec=grid_spec,
        compiler_params=pltpu.CompilerParams(
            dimension_semantics=("parallel", "arbitrary"),
            vmem_limit_bytes=vmem_limit),
    )(x_2d, wih_p, whh_p, bfold, bhhn)

    return out_p[:B, :H].astype(x.dtype)


def _gru_reference(x, w_ih, w_hh, b_ih, b_hh):
    """Pure-JAX reference (PyTorch GRU equations), for correctness check."""
    B, S, I = x.shape
    H = w_hh.shape[1]
    h0 = jnp.zeros((B, H), jnp.float32)

    def step(h, x_t):
        gi = x_t.astype(jnp.float32) @ w_ih.T + b_ih
        gh = h @ w_hh.T + b_hh
        i_r, i_z, i_n = gi[:, :H], gi[:, H:2 * H], gi[:, 2 * H:]
        h_r, h_z, h_n = gh[:, :H], gh[:, H:2 * H], gh[:, 2 * H:]
        r = jax.nn.sigmoid(i_r + h_r)
        z = jax.nn.sigmoid(i_z + h_z)
        n = jnp.tanh(i_n + r * h_n)
        h_new = (1.0 - z) * n + z * h
        return h_new, None

    h_fin, _ = lax.scan(step, h0, jnp.transpose(x, (1, 0, 2)))
    return h_fin


if __name__ == "__main__":
    # Shapes implied by the module: (batch, seq_len, input_size) -> (batch, hidden)
    batch, seq_len, input_size, hidden_size = 2, 8, 4, 32

    key = jax.random.PRNGKey(0)
    k_x, k1, k2, k3, k4 = jax.random.split(key, 5)

    x = jax.random.normal(k_x, (batch, seq_len, input_size), dtype=jnp.float32)

    # Parameter init mimicking PyTorch GRU (uniform(-1/sqrt(H), 1/sqrt(H))).
    bound = 1.0 / np.sqrt(hidden_size)
    w_ih = jax.random.uniform(k1, (3 * hidden_size, input_size), jnp.float32, -bound, bound)
    w_hh = jax.random.uniform(k2, (3 * hidden_size, hidden_size), jnp.float32, -bound, bound)
    b_ih = jax.random.uniform(k3, (3 * hidden_size,), jnp.float32, -bound, bound)
    b_hh = jax.random.uniform(k4, (3 * hidden_size,), jnp.float32, -bound, bound)

    ref = jax.block_until_ready(_gru_reference(x, w_ih, w_hh, b_ih, b_hh))

    # f32 matmul-operand path — tight tolerance against the reference.
    out_f32 = jax.block_until_ready(
        context_encoder_forward(x, w_ih, w_hh, b_ih, b_hh, matmul_dtype=jnp.float32))
    assert out_f32.shape == (batch, hidden_size)
    np.testing.assert_allclose(np.asarray(out_f32), np.asarray(ref), rtol=1e-5, atol=1e-5)

    # Default bf16 matmul-operand path (recommended on v5e/v6e/v7x) — loose tolerance.
    out_bf16 = jax.block_until_ready(
        context_encoder_forward(x, w_ih, w_hh, b_ih, b_hh))
    assert out_bf16.shape == (batch, hidden_size)
    np.testing.assert_allclose(np.asarray(out_bf16), np.asarray(ref), rtol=2e-2, atol=2e-2)

    print("KERNEL_OK")
</pallas_src>

<mosaic_0001>
module attributes {stable_mosaic.version = 11 : i64} {
  func.func @_gru_kernel(%arg0: i32, %arg1: i32, %arg2: memref<64x8xf32, #tpu.memory_space<vmem>>, %arg3: memref<8x384xf32, #tpu.memory_space<vmem>>, %arg4: memref<128x384xf32, #tpu.memory_space<vmem>>, %arg5: memref<1x384xf32, #tpu.memory_space<vmem>>, %arg6: memref<1x128xf32, #tpu.memory_space<vmem>>, %arg7: memref<8x128xf32, #tpu.memory_space<vmem>>, %arg8: memref<64x384xf32, #tpu.memory_space<vmem>>, %arg9: memref<8x128xf32, #tpu.memory_space<vmem>>) attributes {dimension_semantics = [#tpu.dimension_semantics<parallel>, #tpu.dimension_semantics<arbitrary>], iteration_bounds = array<i64: 1, 1>, scalar_prefetch = 0 : i64, scratch_operands = 2 : i64, tpu.core_type = #tpu.core_type<tc>, window_params = [{transform_indices = @transform_0, window_bounds = array<i64: 64, 8>}, {pipeline_mode = #tpu.pipeline_mode<synchronous>, transform_indices = @transform_1, window_bounds = array<i64: 8, 384>}, {pipeline_mode = #tpu.pipeline_mode<synchronous>, transform_indices = @transform_2, window_bounds = array<i64: 128, 384>}, {pipeline_mode = #tpu.pipeline_mode<synchronous>, transform_indices = @transform_3, window_bounds = array<i64: 1, 384>}, {pipeline_mode = #tpu.pipeline_mode<synchronous>, transform_indices = @transform_4, window_bounds = array<i64: 1, 128>}, {transform_indices = @transform_5, window_bounds = array<i64: 8, 128>}]} {
    %c0_i32 = arith.constant 0 : i32
    %0 = arith.cmpi eq, %arg1, %c0_i32 : i32
    %1 = arith.extui %0 : i1 to i32
    %c0_i32_0 = arith.constant 0 : i32
    %2 = arith.cmpi ne, %1, %c0_i32_0 : i32
    scf.if %2 {
      %cst_67 = arith.constant 0.000000e+00 : f32
      %275 = vector.broadcast %cst_67 : f32 to vector<8x128xf32>
      %c0_68 = arith.constant 0 : index
      %c0_69 = arith.constant 0 : index
      %276 = vector.load %arg9[%c0_68, %c0_69] : memref<8x128xf32, #tpu.memory_space<vmem>>, vector<8x128xf32>
      tpu.vector_store %arg9[%c0_68, %c0_69], %275 {strides = array<i32>} : memref<8x128xf32, #tpu.memory_space<vmem>>, vector<8x128xf32>,
    } else {
    }
    %c0 = arith.constant 0 : index
    %c0_1 = arith.constant 0 : index
    %3 = vector.load %arg2[%c0, %c0_1] : memref<64x8xf32, #tpu.memory_space<vmem>>, vector<64x8xf32>
    %c0_2 = arith.constant 0 : index
    %c0_3 = arith.constant 0 : index
    %4 = vector.load %arg3[%c0_2, %c0_3] : memref<8x384xf32, #tpu.memory_space<vmem>>, vector<8x384xf32>
    %cst = arith.constant dense<0.000000e+00> : vector<64x384xf32>
    %5 = tpu.matmul %3, %4, %cst {dimension_numbers = #tpu.dot_dimension_numbers<[1], [0], [0], [1], [0, 0, 1, 1], [], []>} : vector<64x8xf32>, vector<8x384xf32>, vector<64x384xf32> -> vector<64x384xf32>
    %c0_4 = arith.constant 0 : index
    %c0_5 = arith.constant 0 : index
    %6 = vector.load %arg5[%c0_4, %c0_5] : memref<1x384xf32, #tpu.memory_space<vmem>>, vector<1x384xf32>
    %7 = vector.broadcast %6 : vector<1x384xf32> to vector<64x384xf32>
    %8 = arith.addf %5, %7 : vector<64x384xf32>
    %c0_6 = arith.constant 0 : index
    %c0_7 = arith.constant 0 : index
    %9 = vector.load %arg8[%c0_6, %c0_7] : memref<64x384xf32, #tpu.memory_space<vmem>>, vector<64x384xf32>
    tpu.vector_store %arg8[%c0_6, %c0_7], %8 {strides = array<i32>} : memref<64x384xf32, #tpu.memory_space<vmem>>, vector<64x384xf32>,
    %c0_8 = arith.constant 0 : index
    %c0_9 = arith.constant 0 : index
    %10 = vector.load %arg4[%c0_8, %c0_9] : memref<128x384xf32, #tpu.memory_space<vmem>>, vector<128x384xf32>
    %c0_10 = arith.constant 0 : index
    %c0_11 = arith.constant 0 : index
    %11 = vector.load %arg6[%c0_10, %c0_11] : memref<1x128xf32, #tpu.memory_space<vmem>>, vector<1x128xf32>
    %12 = vector.shape_cast %11 : vector<1x128xf32> to vector<1x128xf32>
    %13 = vector.broadcast %12 : vector<1x128xf32> to vector<8x128xf32>
    %c0_12 = arith.constant 0 : index
    %c0_13 = arith.constant 0 : index
    %14 = vector.load %arg9[%c0_12, %c0_13] : memref<8x128xf32, #tpu.memory_space<vmem>>, vector<8x128xf32>
    %c0_i32_14 = arith.constant 0 : i32
    %c8_i32 = arith.constant 8 : i32
    %15 = arith.muli %c0_i32_14, %c8_i32 : i32
    %16 = tpu.assume_multiple %15, 8 : i32
    %17 = arith.index_cast %16 : i32 to index
    %c0_15 = arith.constant 0 : index
    %18 = vector.load %arg8[%17, %c0_15] : memref<64x384xf32, #tpu.memory_space<vmem>>, vector<8x384xf32>
    %cst_16 = arith.constant dense<0.000000e+00> : vector<8x384xf32>
    %19 = tpu.matmul %14, %10, %cst_16 {dimension_numbers = #tpu.dot_dimension_numbers<[1], [0], [0], [1], [0, 0, 1, 1], [], []>} : vector<8x128xf32>, vector<128x384xf32>, vector<8x384xf32> -> vector<8x384xf32>
    %20 = vector.extract_strided_slice %18 {offsets = [0, 0], sizes = [8, 128], strides = [1, 1]} : vector<8x384xf32> to vector<8x128xf32>
    %21 = vector.extract_strided_slice %19 {offsets = [0, 0], sizes = [8, 128], strides = [1, 1]} : vector<8x384xf32> to vector<8x128xf32>
    %22 = arith.addf %20, %21 : vector<8x128xf32>
    %23 = arith.negf %22 : vector<8x128xf32>
    %24 = math.exp %23 : vector<8x128xf32>
    %cst_17 = arith.constant 1.000000e+00 : f32
    %25 = vector.broadcast %cst_17 : f32 to vector<8x128xf32>
    %26 = arith.addf %25, %24 : vector<8x128xf32>
    %27 = arith.divf %25, %26 : vector<8x128xf32>
    %28 = vector.extract_strided_slice %18 {offsets = [0, 128], sizes = [8, 128], strides = [1, 1]} : vector<8x384xf32> to vector<8x128xf32>
    %29 = vector.extract_strided_slice %19 {offsets = [0, 128], sizes = [8, 128], strides = [1, 1]} : vector<8x384xf32> to vector<8x128xf32>
    %30 = arith.addf %28, %29 : vector<8x128xf32>
    %31 = arith.negf %30 : vector<8x128xf32>
    %32 = math.exp %31 : vector<8x128xf32>
    %cst_18 = arith.constant 1.000000e+00 : f32
    %33 = vector.broadcast %cst_18 : f32 to vector<8x128xf32>
    %34 = arith.addf %33, %32 : vector<8x128xf32>
    %35 = arith.divf %33, %34 : vector<8x128xf32>
    %36 = vector.extract_strided_slice %18 {offsets = [0, 256], sizes = [8, 128], strides = [1, 1]} : vector<8x384xf32> to vector<8x128xf32>
    %37 = vector.extract_strided_slice %19 {offsets = [0, 256], sizes = [8, 128], strides = [1, 1]} : vector<8x384xf32> to vector<8x128xf32>
    %38 = arith.addf %37, %13 : vector<8x128xf32>
    %39 = arith.mulf %27, %38 : vector<8x128xf32>
    %40 = arith.addf %36, %39 : vector<8x128xf32>
    %41 = math.tanh %40 : vector<8x128xf32>
    %cst_19 = arith.constant 1.000000e+00 : f32
    %42 = vector.broadcast %cst_19 : f32 to vector<8x128xf32>
    %43 = arith.subf %42, %35 : vector<8x128xf32>
    %44 = arith.mulf %43, %41 : vector<8x128xf32>
    %45 = arith.mulf %35, %14 : vector<8x128xf32>
    %46 = arith.addf %44, %45 : vector<8x128xf32>
    %c1_i32 = arith.constant 1 : i32
    %c8_i32_20 = arith.constant 8 : i32
    %47 = arith.muli %c1_i32, %c8_i32_20 : i32
    %48 = tpu.assume_multiple %47, 8 : i32
    %49 = arith.index_cast %48 : i32 to index
    %c0_21 = arith.constant 0 : index
    %50 = vector.load %arg8[%49, %c0_21] : memref<64x384xf32, #tpu.memory_space<vmem>>, vector<8x384xf32>
    %cst_22 = arith.constant dense<0.000000e+00> : vector<8x384xf32>
    %51 = tpu.matmul %46, %10, %cst_22 {dimension_numbers = #tpu.dot_dimension_numbers<[1], [0], [0], [1], [0, 0, 1, 1], [], []>} : vector<8x128xf32>, vector<128x384xf32>, vector<8x384xf32> -> vector<8x384xf32>
    %52 = vector.extract_strided_slice %50 {offsets = [0, 0], sizes = [8, 128], strides = [1, 1]} : vector<8x384xf32> to vector<8x128xf32>
    %53 = vector.extract_strided_slice %51 {offsets = [0, 0], sizes = [8, 128], strides = [1, 1]} : vector<8x384xf32> to vector<8x128xf32>
    %54 = arith.addf %52, %53 : vector<8x128xf32>
    %55 = arith.negf %54 : vector<8x128xf32>
    %56 = math.exp %55 : vector<8x128xf32>
    %cst_23 = arith.constant 1.000000e+00 : f32
    %57 = vector.broadcast %cst_23 : f32 to vector<8x128xf32>
    %58 = arith.addf %57, %56 : vector<8x128xf32>
    %59 = arith.divf %57, %58 : vector<8x128xf32>
    %60 = vector.extract_strided_slice %50 {offsets = [0, 128], sizes = [8, 128], strides = [1, 1]} : vector<8x384xf32> to vector<8x128xf32>
    %61 = vector.extract_strided_slice %51 {offsets = [0, 128], sizes = [8, 128], strides = [1, 1]} : vector<8x384xf32> to vector<8x128xf32>
    %62 = arith.addf %60, %61 : vector<8x128xf32>
    %63 = arith.negf %62 : vector<8x128xf32>
    %64 = math.exp %63 : vector<8x128xf32>
    %cst_24 = arith.constant 1.000000e+00 : f32
    %65 = vector.broadcast %cst_24 : f32 to vector<8x128xf32>
    %66 = arith.addf %65, %64 : vector<8x128xf32>
    %67 = arith.divf %65, %66 : vector<8x128xf32>
    %68 = vector.extract_strided_slice %50 {offsets = [0, 256], sizes = [8, 128], strides = [1, 1]} : vector<8x384xf32> to vector<8x128xf32>
    %69 = vector.extract_strided_slice %51 {offsets = [0, 256], sizes = [8, 128], strides = [1, 1]} : vector<8x384xf32> to vector<8x128xf32>
    %70 = arith.addf %69, %13 : vector<8x128xf32>
    %71 = arith.mulf %59, %70 : vector<8x128xf32>
    %72 = arith.addf %68, %71 : vector<8x128xf32>
    %73 = math.tanh %72 : vector<8x128xf32>
    %cst_25 = arith.constant 1.000000e+00 : f32
    %74 = vector.broadcast %cst_25 : f32 to vector<8x128xf32>
    %75 = arith.subf %74, %67 : vector<8x128xf32>
    %76 = arith.mulf %75, %73 : vector<8x128xf32>
    %77 = arith.mulf %67, %46 : vector<8x128xf32>
    %78 = arith.addf %76, %77 : vector<8x128xf32>
    %c2_i32 = arith.constant 2 : i32
    %c8_i32_26 = arith.constant 8 : i32
    %79 = arith.muli %c2_i32, %c8_i32_26 : i32
    %80 = tpu.assume_multiple %79, 8 : i32
    %81 = arith.index_cast %80 : i32 to index
    %c0_27 = arith.constant 0 : index
    %82 = vector.load %arg8[%81, %c0_27] : memref<64x384xf32, #tpu.memory_space<vmem>>, vector<8x384xf32>
    %cst_28 = arith.constant dense<0.000000e+00> : vector<8x384xf32>
    %83 = tpu.matmul %78, %10, %cst_28 {dimension_numbers = #tpu.dot_dimension_numbers<[1], [0], [0], [1], [0, 0, 1, 1], [], []>} : vector<8x128xf32>, vector<128x384xf32>, vector<8x384xf32> -> vector<8x384xf32>
    %84 = vector.extract_strided_slice %82 {offsets = [0, 0], sizes = [8, 128], strides = [1, 1]} : vector<8x384xf32> to vector<8x128xf32>
    %85 = vector.extract_strided_slice %83 {offsets = [0, 0], sizes = [8, 128], strides = [1, 1]} : vector<8x384xf32> to vector<8x128xf32>
    %86 = arith.addf %84, %85 : vector<8x128xf32>
    %87 = arith.negf %86 : vector<8x128xf32>
    %88 = math.exp %87 : vector<8x128xf32>
    %cst_29 = arith.constant 1.000000e+00 : f32
    %89 = vector.broadcast %cst_29 : f32 to vector<8x128xf32>
    %90 = arith.addf %89, %88 : vector<8x128xf32>
    %91 = arith.divf %89, %90 : vector<8x128xf32>
    %92 = vector.extract_strided_slice %82 {offsets = [0, 128], sizes = [8, 128], strides = [1, 1]} : vector<8x384xf32> to vector<8x128xf32>
    %93 = vector.extract_strided_slice %83 {offsets = [0, 128], sizes = [8, 128], strides = [1, 1]} : vector<8x384xf32> to vector<8x128xf32>
    %94 = arith.addf %92, %93 : vector<8x128xf32>
    %95 = arith.negf %94 : vector<8x128xf32>
    %96 = math.exp %95 : vector<8x128xf32>
    %cst_30 = arith.constant 1.000000e+00 : f32
    %97 = vector.broadcast %cst_30 : f32 to vector<8x128xf32>
    %98 = arith.addf %97, %96 : vector<8x128xf32>
    %99 = arith.divf %97, %98 : vector<8x128xf32>
    %100 = vector.extract_strided_slice %82 {offsets = [0, 256], sizes = [8, 128], strides = [1, 1]} : vector<8x384xf32> to vector<8x128xf32>
    %101 = vector.extract_strided_slice %83 {offsets = [0, 256], sizes = [8, 128], strides = [1, 1]} : vector<8x384xf32> to vector<8x128xf32>
    %102 = arith.addf %101, %13 : vector<8x128xf32>
    %103 = arith.mulf %91, %102 : vector<8x128xf32>
    %104 = arith.addf %100, %103 : vector<8x128xf32>
    %105 = math.tanh %104 : vector<8x128xf32>
    %cst_31 = arith.constant 1.000000e+00 : f32
    %106 = vector.broadcast %cst_31 : f32 to vector<8x128xf32>
    %107 = arith.subf %106, %99 : vector<8x128xf32>
    %108 = arith.mulf %107, %105 : vector<8x128xf32>
    %109 = arith.mulf %99, %78 : vector<8x128xf32>
    %110 = arith.addf %108, %109 : vector<8x128xf32>
    %c3_i32 = arith.constant 3 : i32
    %c8_i32_32 = arith.constant 8 : i32
    %111 = arith.muli %c3_i32, %c8_i32_32 : i32
    %112 = tpu.assume_multiple %111, 8 : i32
    %113 = arith.index_cast %112 : i32 to index
    %c0_33 = arith.constant 0 : index
    %114 = vector.load %arg8[%113, %c0_33] : memref<64x384xf32, #tpu.memory_space<vmem>>, vector<8x384xf32>
    %cst_34 = arith.constant dense<0.000000e+00> : vector<8x384xf32>
    %115 = tpu.matmul %110, %10, %cst_34 {dimension_numbers = #tpu.dot_dimension_numbers<[1], [0], [0], [1], [0, 0, 1, 1], [], []>} : vector<8x128xf32>, vector<128x384xf32>, vector<8x384xf32> -> vector<8x384xf32>
    %116 = vector.extract_strided_slice %114 {offsets = [0, 0], sizes = [8, 128], strides = [1, 1]} : vector<8x384xf32> to vector<8x128xf32>
    %117 = vector.extract_strided_slice %115 {offsets = [0, 0], sizes = [8, 128], strides = [1, 1]} : vector<8x384xf32> to vector<8x128xf32>
    %118 = arith.addf %116, %117 : vector<8x128xf32>
    %119 = arith.negf %118 : vector<8x128xf32>
    %120 = math.exp %119 : vector<8x128xf32>
    %cst_35 = arith.constant 1.000000e+00 : f32
    %121 = vector.broadcast %cst_35 : f32 to vector<8x128xf32>
    %122 = arith.addf %121, %120 : vector<8x128xf32>
    %123 = arith.divf %121, %122 : vector<8x128xf32>
    %124 = vector.extract_strided_slice %114 {offsets = [0, 128], sizes = [8, 128], strides = [1, 1]} : vector<8x384xf32> to vector<8x128xf32>
    %125 = vector.extract_strided_slice %115 {offsets = [0, 128], sizes = [8, 128], strides = [1, 1]} : vector<8x384xf32> to vector<8x128xf32>
    %126 = arith.addf %124, %125 : vector<8x128xf32>
    %127 = arith.negf %126 : vector<8x128xf32>
    %128 = math.exp %127 : vector<8x128xf32>
    %cst_36 = arith.constant 1.000000e+00 : f32
    %129 = vector.broadcast %cst_36 : f32 to vector<8x128xf32>
    %130 = arith.addf %129, %128 : vector<8x128xf32>
    %131 = arith.divf %129, %130 : vector<8x128xf32>
    %132 = vector.extract_strided_slice %114 {offsets = [0, 256], sizes = [8, 128], strides = [1, 1]} : vector<8x384xf32> to vector<8x128xf32>
    %133 = vector.extract_strided_slice %115 {offsets = [0, 256], sizes = [8, 128], strides = [1, 1]} : vector<8x384xf32> to vector<8x128xf32>
    %134 = arith.addf %133, %13 : vector<8x128xf32>
    %135 = arith.mulf %123, %134 : vector<8x128xf32>
    %136 = arith.addf %132, %135 : vector<8x128xf32>
    %137 = math.tanh %136 : vector<8x128xf32>
    %cst_37 = arith.constant 1.000000e+00 : f32
    %138 = vector.broadcast %cst_37 : f32 to vector<8x128xf32>
    %139 = arith.subf %138, %131 : vector<8x128xf32>
    %140 = arith.mulf %139, %137 : vector<8x128xf32>
    %141 = arith.mulf %131, %110 : vector<8x128xf32>
    %142 = arith.addf %140, %141 : vector<8x128xf32>
    %c4_i32 = arith.constant 4 : i32
    %c8_i32_38 = arith.constant 8 : i32
    %143 = arith.muli %c4_i32, %c8_i32_38 : i32
    %144 = tpu.assume_multiple %143, 8 : i32
    %145 = arith.index_cast %144 : i32 to index
    %c0_39 = arith.constant 0 : index
    %146 = vector.load %arg8[%145, %c0_39] : memref<64x384xf32, #tpu.memory_space<vmem>>, vector<8x384xf32>
    %cst_40 = arith.constant dense<0.000000e+00> : vector<8x384xf32>
    %147 = tpu.matmul %142, %10, %cst_40 {dimension_numbers = #tpu.dot_dimension_numbers<[1], [0], [0], [1], [0, 0, 1, 1], [], []>} : vector<8x128xf32>, vector<128x384xf32>, vector<8x384xf32> -> vector<8x384xf32>
    %148 = vector.extract_strided_slice %146 {offsets = [0, 0], sizes = [8, 128], strides = [1, 1]} : vector<8x384xf32> to vector<8x128xf32>
    %149 = vector.extract_strided_slice %147 {offsets = [0, 0], sizes = [8, 128], strides = [1, 1]} : vector<8x384xf32> to vector<8x128xf32>
    %150 = arith.addf %148, %149 : vector<8x128xf32>
    %151 = arith.negf %150 : vector<8x128xf32>
    %152 = math.exp %151 : vector<8x128xf32>
    %cst_41 = arith.constant 1.000000e+00 : f32
    %153 = vector.broadcast %cst_41 : f32 to vector<8x128xf32>
    %154 = arith.addf %153, %152 : vector<8x128xf32>
    %155 = arith.divf %153, %154 : vector<8x128xf32>
    %156 = vector.extract_strided_slice %146 {offsets = [0, 128], sizes = [8, 128], strides = [1, 1]} : vector<8x384xf32> to vector<8x128xf32>
    %157 = vector.extract_strided_slice %147 {offsets = [0, 128], sizes = [8, 128], strides = [1, 1]} : vector<8x384xf32> to vector<8x128xf32>
    %158 = arith.addf %156, %157 : vector<8x128xf32>
    %159 = arith.negf %158 : vector<8x128xf32>
    %160 = math.exp %159 : vector<8x128xf32>
    %cst_42 = arith.constant 1.000000e+00 : f32
    %161 = vector.broadcast %cst_42 : f32 to vector<8x128xf32>
    %162 = arith.addf %161, %160 : vector<8x128xf32>
    %163 = arith.divf %161, %162 : vector<8x128xf32>
    %164 = vector.extract_strided_slice %146 {offsets = [0, 256], sizes = [8, 128], strides = [1, 1]} : vector<8x384xf32> to vector<8x128xf32>
    %165 = vector.extract_strided_slice %147 {offsets = [0, 256], sizes = [8, 128], strides = [1, 1]} : vector<8x384xf32> to vector<8x128xf32>
    %166 = arith.addf %165, %13 : vector<8x128xf32>
    %167 = arith.mulf %155, %166 : vector<8x128xf32>
    %168 = arith.addf %164, %167 : vector<8x128xf32>
    %169 = math.tanh %168 : vector<8x128xf32>
    %cst_43 = arith.constant 1.000000e+00 : f32
    %170 = vector.broadcast %cst_43 : f32 to vector<8x128xf32>
    %171 = arith.subf %170, %163 : vector<8x128xf32>
    %172 = arith.mulf %171, %169 : vector<8x128xf32>
    %173 = arith.mulf %163, %142 : vector<8x128xf32>
    %174 = arith.addf %172, %173 : vector<8x128xf32>
    %c5_i32 = arith.constant 5 : i32
    %c8_i32_44 = arith.constant 8 : i32
    %175 = arith.muli %c5_i32, %c8_i32_44 : i32
    %176 = tpu.assume_multiple %175, 8 : i32
    %177 = arith.index_cast %176 : i32 to index
    %c0_45 = arith.constant 0 : index
    %178 = vector.load %arg8[%177, %c0_45] : memref<64x384xf32, #tpu.memory_space<vmem>>, vector<8x384xf32>
    %cst_46 = arith.constant dense<0.000000e+00> : vector<8x384xf32>
    %179 = tpu.matmul %174, %10, %cst_46 {dimension_numbers = #tpu.dot_dimension_numbers<[1], [0], [0], [1], [0, 0, 1, 1], [], []>} : vector<8x128xf32>, vector<128x384xf32>, vector<8x384xf32> -> vector<8x384xf32>
    %180 = vector.extract_strided_slice %178 {offsets = [0, 0], sizes = [8, 128], strides = [1, 1]} : vector<8x384xf32> to vector<8x128xf32>
    %181 = vector.extract_strided_slice %179 {offsets = [0, 0], sizes = [8, 128], strides = [1, 1]} : vector<8x384xf32> to vector<8x128xf32>
    %182 = arith.addf %180, %181 : vector<8x128xf32>
    %183 = arith.negf %182 : vector<8x128xf32>
    %184 = math.exp %183 : vector<8x128xf32>
    %cst_47 = arith.constant 1.000000e+00 : f32
    %185 = vector.broadcast %cst_47 : f32 to vector<8x128xf32>
    %186 = arith.addf %185, %184 : vector<8x128xf32>
    %187 = arith.divf %185, %186 : vector<8x128xf32>
    %188 = vector.extract_strided_slice %178 {offsets = [0, 128], sizes = [8, 128], strides = [1, 1]} : vector<8x384xf32> to vector<8x128xf32>
    %189 = vector.extract_strided_slice %179 {offsets = [0, 128], sizes = [8, 128], strides = [1, 1]} : vector<8x384xf32> to vector<8x128xf32>
    %190 = arith.addf %188, %189 : vector<8x128xf32>
    %191 = arith.negf %190 : vector<8x128xf32>
    %192 = math.exp %191 : vector<8x128xf32>
    %cst_48 = arith.constant 1.000000e+00 : f32
    %193 = vector.broadcast %cst_48 : f32 to vector<8x128xf32>
    %194 = arith.addf %193, %192 : vector<8x128xf32>
    %195 = arith.divf %193, %194 : vector<8x128xf32>
    %196 = vector.extract_strided_slice %178 {offsets = [0, 256], sizes = [8, 128], strides = [1, 1]} : vector<8x384xf32> to vector<8x128xf32>
    %197 = vector.extract_strided_slice %179 {offsets = [0, 256], sizes = [8, 128], strides = [1, 1]} : vector<8x384xf32> to vector<8x128xf32>
    %198 = arith.addf %197, %13 : vector<8x128xf32>
    %199 = arith.mulf %187, %198 : vector<8x128xf32>
    %200 = arith.addf %196, %199 : vector<8x128xf32>
    %201 = math.tanh %200 : vector<8x128xf32>
    %cst_49 = arith.constant 1.000000e+00 : f32
    %202 = vector.broadcast %cst_49 : f32 to vector<8x128xf32>
    %203 = arith.subf %202, %195 : vector<8x128xf32>
    %204 = arith.mulf %203, %201 : vector<8x128xf32>
    %205 = arith.mulf %195, %174 : vector<8x128xf32>
    %206 = arith.addf %204, %205 : vector<8x128xf32>
    %c6_i32 = arith.constant 6 : i32
    %c8_i32_50 = arith.constant 8 : i32
    %207 = arith.muli %c6_i32, %c8_i32_50 : i32
    %208 = tpu.assume_multiple %207, 8 : i32
    %209 = arith.index_cast %208 : i32 to index
    %c0_51 = arith.constant 0 : index
    %210 = vector.load %arg8[%209, %c0_51] : memref<64x384xf32, #tpu.memory_space<vmem>>, vector<8x384xf32>
    %cst_52 = arith.constant dense<0.000000e+00> : vector<8x384xf32>
    %211 = tpu.matmul %206, %10, %cst_52 {dimension_numbers = #tpu.dot_dimension_numbers<[1], [0], [0], [1], [0, 0, 1, 1], [], []>} : vector<8x128xf32>, vector<128x384xf32>, vector<8x384xf32> -> vector<8x384xf32>
    %212 = vector.extract_strided_slice %210 {offsets = [0, 0], sizes = [8, 128], strides = [1, 1]} : vector<8x384xf32> to vector<8x128xf32>
    %213 = vector.extract_strided_slice %211 {offsets = [0, 0], sizes = [8, 128], strides = [1, 1]} : vector<8x384xf32> to vector<8x128xf32>
    %214 = arith.addf %212, %213 : vector<8x128xf32>
    %215 = arith.negf %214 : vector<8x128xf32>
    %216 = math.exp %215 : vector<8x128xf32>
    %cst_53 = arith.constant 1.000000e+00 : f32
    %217 = vector.broadcast %cst_53 : f32 to vector<8x128xf32>
    %218 = arith.addf %217, %216 : vector<8x128xf32>
    %219 = arith.divf %217, %218 : vector<8x128xf32>
    %220 = vector.extract_strided_slice %210 {offsets = [0, 128], sizes = [8, 128], strides = [1, 1]} : vector<8x384xf32> to vector<8x128xf32>
    %221 = vector.extract_strided_slice %211 {offsets = [0, 128], sizes = [8, 128], strides = [1, 1]} : vector<8x384xf32> to vector<8x128xf32>
    %222 = arith.addf %220, %221 : vector<8x128xf32>
    %223 = arith.negf %222 : vector<8x128xf32>
    %224 = math.exp %223 : vector<8x128xf32>
    %cst_54 = arith.constant 1.000000e+00 : f32
    %225 = vector.broadcast %cst_54 : f32 to vector<8x128xf32>
    %226 = arith.addf %225, %224 : vector<8x128xf32>
    %227 = arith.divf %225, %226 : vector<8x128xf32>
    %228 = vector.extract_strided_slice %210 {offsets = [0, 256], sizes = [8, 128], strides = [1, 1]} : vector<8x384xf32> to vector<8x128xf32>
    %229 = vector.extract_strided_slice %211 {offsets = [0, 256], sizes = [8, 128], strides = [1, 1]} : vector<8x384xf32> to vector<8x128xf32>
    %230 = arith.addf %229, %13 : vector<8x128xf32>
    %231 = arith.mulf %219, %230 : vector<8x128xf32>
    %232 = arith.addf %228, %231 : vector<8x128xf32>
    %233 = math.tanh %232 : vector<8x128xf32>
    %cst_55 = arith.constant 1.000000e+00 : f32
    %234 = vector.broadcast %cst_55 : f32 to vector<8x128xf32>
    %235 = arith.subf %234, %227 : vector<8x128xf32>
    %236 = arith.mulf %235, %233 : vector<8x128xf32>
    %237 = arith.mulf %227, %206 : vector<8x128xf32>
    %238 = arith.addf %236, %237 : vector<8x128xf32>
    %c7_i32 = arith.constant 7 : i32
    %c8_i32_56 = arith.constant 8 : i32
    %239 = arith.muli %c7_i32, %c8_i32_56 : i32
    %240 = tpu.assume_multiple %239, 8 : i32
    %241 = arith.index_cast %240 : i32 to index
    %c0_57 = arith.constant 0 : index
    %242 = vector.load %arg8[%241, %c0_57] : memref<64x384xf32, #tpu.memory_space<vmem>>, vector<8x384xf32>
    %cst_58 = arith.constant dense<0.000000e+00> : vector<8x384xf32>
    %243 = tpu.matmul %238, %10, %cst_58 {dimension_numbers = #tpu.dot_dimension_numbers<[1], [0], [0], [1], [0, 0, 1, 1], [], []>} : vector<8x128xf32>, vector<128x384xf32>, vector<8x384xf32> -> vector<8x384xf32>
    %244 = vector.extract_strided_slice %242 {offsets = [0, 0], sizes = [8, 128], strides = [1, 1]} : vector<8x384xf32> to vector<8x128xf32>
    %245 = vector.extract_strided_slice %243 {offsets = [0, 0], sizes = [8, 128], strides = [1, 1]} : vector<8x384xf32> to vector<8x128xf32>
    %246 = arith.addf %244, %245 : vector<8x128xf32>
    %247 = arith.negf %246 : vector<8x128xf32>
    %248 = math.exp %247 : vector<8x128xf32>
    %cst_59 = arith.constant 1.000000e+00 : f32
    %249 = vector.broadcast %cst_59 : f32 to vector<8x128xf32>
    %250 = arith.addf %249, %248 : vector<8x128xf32>
    %251 = arith.divf %249, %250 : vector<8x128xf32>
    %252 = vector.extract_strided_slice %242 {offsets = [0, 128], sizes = [8, 128], strides = [1, 1]} : vector<8x384xf32> to vector<8x128xf32>
    %253 = vector.extract_strided_slice %243 {offsets = [0, 128], sizes = [8, 128], strides = [1, 1]} : vector<8x384xf32> to vector<8x128xf32>
    %254 = arith.addf %252, %253 : vector<8x128xf32>
    %255 = arith.negf %254 : vector<8x128xf32>
    %256 = math.exp %255 : vector<8x128xf32>
    %cst_60 = arith.constant 1.000000e+00 : f32
    %257 = vector.broadcast %cst_60 : f32 to vector<8x128xf32>
    %258 = arith.addf %257, %256 : vector<8x128xf32>
    %259 = arith.divf %257, %258 : vector<8x128xf32>
    %260 = vector.extract_strided_slice %242 {offsets = [0, 256], sizes = [8, 128], strides = [1, 1]} : vector<8x384xf32> to vector<8x128xf32>
    %261 = vector.extract_strided_slice %243 {offsets = [0, 256], sizes = [8, 128], strides = [1, 1]} : vector<8x384xf32> to vector<8x128xf32>
    %262 = arith.addf %261, %13 : vector<8x128xf32>
    %263 = arith.mulf %251, %262 : vector<8x128xf32>
    %264 = arith.addf %260, %263 : vector<8x128xf32>
    %265 = math.tanh %264 : vector<8x128xf32>
    %cst_61 = arith.constant 1.000000e+00 : f32
    %266 = vector.broadcast %cst_61 : f32 to vector<8x128xf32>
    %267 = arith.subf %266, %259 : vector<8x128xf32>
    %268 = arith.mulf %267, %265 : vector<8x128xf32>
    %269 = arith.mulf %259, %238 : vector<8x128xf32>
    %270 = arith.addf %268, %269 : vector<8x128xf32>
    %c8_i32_62 = arith.constant 8 : i32
    %c0_63 = arith.constant 0 : index
    %c0_64 = arith.constant 0 : index
    %271 = vector.load %arg9[%c0_63, %c0_64] : memref<8x128xf32, #tpu.memory_space<vmem>>, vector<8x128xf32>
    tpu.vector_store %arg9[%c0_63, %c0_64], %270 {strides = array<i32>} : memref<8x128xf32, #tpu.memory_space<vmem>>, vector<8x128xf32>,
    %c0_i32_65 = arith.constant 0 : i32
    %272 = arith.cmpi eq, %arg1, %c0_i32_65 : i32
    %273 = arith.extui %272 : i1 to i32
    %c0_i32_66 = arith.constant 0 : i32
    %274 = arith.cmpi ne, %273, %c0_i32_66 : i32
    scf.if %274 {
      %c0_67 = arith.constant 0 : index
      %c0_68 = arith.constant 0 : index
      %275 = vector.load %arg7[%c0_67, %c0_68] : memref<8x128xf32, #tpu.memory_space<vmem>>, vector<8x128xf32>
      tpu.vector_store %arg7[%c0_67, %c0_68], %270 {strides = array<i32>} : memref<8x128xf32, #tpu.memory_space<vmem>>, vector<8x128xf32>,
    } else {
    }
    return
  }
  func.func @transform_0(%arg0: i32, %arg1: i32) -> (i32, i32) {
    %c1_i32 = arith.constant 1 : i32
    %0 = arith.muli %arg0, %c1_i32 : i32
    %1 = arith.addi %0, %arg1 : i32
    %c0_i32 = arith.constant 0 : i32
    %c0_i32_0 = arith.constant 0 : i32
    return %1, %c0_i32 : i32, i32
  }
  func.func @transform_1(%arg0: i32, %arg1: i32) -> (i32, i32) {
    %c0_i32 = arith.constant 0 : i32
    %c0_i32_0 = arith.constant 0 : i32
    %c0_i32_1 = arith.constant 0 : i32
    return %c0_i32, %c0_i32_0 : i32, i32
  }
  func.func @transform_2(%arg0: i32, %arg1: i32) -> (i32, i32) {
    %c0_i32 = arith.constant 0 : i32
    %c0_i32_0 = arith.constant 0 : i32
    %c0_i32_1 = arith.constant 0 : i32
    return %c0_i32, %c0_i32_0 : i32, i32
  }
  func.func @transform_3(%arg0: i32, %arg1: i32) -> (i32, i32) {
    %c0_i32 = arith.constant 0 : i32
    %c0_i32_0 = arith.constant 0 : i32
    %c0_i32_1 = arith.constant 0 : i32
    return %c0_i32, %c0_i32_0 : i32, i32
  }
  func.func @transform_4(%arg0: i32, %arg1: i32) -> (i32, i32) {
    %c0_i32 = arith.constant 0 : i32
    %c0_i32_0 = arith.constant 0 : i32
    %c0_i32_1 = arith.constant 0 : i32
    return %c0_i32, %c0_i32_0 : i32, i32
  }
  func.func @transform_5(%arg0: i32, %arg1: i32) -> (i32, i32) {
    %c0_i32 = arith.constant 0 : i32
    %c0_i32_0 = arith.constant 0 : i32
    return %arg0, %c0_i32 : i32, i32
  }
}

</mosaic_0001>

<llo_original>
// kernel: tpu_custom_call.1
$region0: #{tpu_custom_call.1}
  #allocation0 [shape = 'u32[]', space=smem, size = 0x4, offset = 0x4, fixed_abs, tag = 'smem constant byte address 0x4 - core index']
  #allocation1 [shape = 'u32[144,128]{1,0:T(1,128)}', space=vmem, size = 0x12000, scoped, tag = 'internal scratch']
  #allocation2 [shape = 'f32[64,384]{1,0:T(8,128)}', space=vmem, size = 0x18000, scoped, tag = 'scratch operand']
  #allocation3 [shape = 'f32[8,128]{1,0:T(8,128)}', space=vmem, size = 0x1000, scoped, tag = 'scratch operand']
  %s0 = inlined_call_operand.vmem [shape: f32[64,8], index: 0, kind: input, shape index: {}]
  %s1 = inlined_call_operand.vmem [shape: f32[8,384], index: 1, kind: input, shape index: {}]
  %s2 = inlined_call_operand.hbm [shape: f32[128,384], index: 2, kind: input, shape index: {}]
  %s3 = inlined_call_operand.vmem [shape: f32[1,384], index: 3, kind: input, shape index: {}]
  %s4 = inlined_call_operand.vmem [shape: f32[1,128], index: 4, kind: input, shape index: {}]
  %s5 = inlined_call_operand.hbm [shape: f32[8,128], index: 5, kind: output, shape index: {}]
  %s6 = sld [smem:[#allocation0]]
  $region42: #{tpu_custom_call.1} parent=0
    _
  %s8 = ssub.s32 1, %s6
  %s9 = scalar_select 0, %s8, %s6
  $region1: #{tpu_custom_call.1} parent=0
    #allocation4 [shape = 'u8[196608]{0}', space=vmem, size = 0x30000, scoped, tag = 'input window, operand 2, single buffered']
    #allocation5 [shape = 's32[1]{0}', space=sflag, size = 0x4, scoped, tag = 'scoped memory for tpu_custom_call.1']
    #allocation6 [shape = 's32[1]{0}', space=sflag, size = 0x4, scoped, tag = 'scoped memory for tpu_custom_call.1']
    #allocation7 [shape = 'u8[4096]{0}', space=vmem, size = 0x1000, scoped, tag = 'output window, operand 0, single buffered']
    %10 = vsyncpa [#allocation5], 0
    %11 = vsyncpa [#allocation6], 0
    // Predicated region
    $region2: #{tpu_custom_call.1} parent=1 // pred_check
      _
    $region3: #{tpu_custom_call.1} parent=1 // pred_check_branch
      %13 = sbr.rel (0) target = $region5
    $region4: #{tpu_custom_call.1} parent=1 // pred_region
      %s14 = sadd.s32 0, 0
      %s15 = smul.u32 8, %s14
      %p16 = scmp.lt.s32.totalorder %s15, 7
      %s17 = scalar_select %p16, %s15, 7
      %s18 = smul.addr %s17, 8
      %s19 = scalar_lea.vmem %s0, %s18
      %s20 = sadd.s32 0, 0
      %s21 = smul.u32 8, %s20
    $region5: #{tpu_custom_call.1} parent=1 // pred_fallthru
      _
    // Predicated region
    $region6: #{tpu_custom_call.1} parent=1 // pred_check
      _
    $region7: #{tpu_custom_call.1} parent=1 // pred_check_branch
      %23 = sbr.rel (0) target = $region9
    $region8: #{tpu_custom_call.1} parent=1 // pred_region
      _
    $region9: #{tpu_custom_call.1} parent=1 // pred_fallthru
      _
    // Predicated region
    $region10: #{tpu_custom_call.1} parent=1 // pred_check
      _
    $region11: #{tpu_custom_call.1} parent=1 // pred_check_branch
      %25 = sbr.rel (0) target = $region13
    $region12: #{tpu_custom_call.1} parent=1 // pred_region
      %s27 = ssub.s32 6144, 6144
      %28 = vsyncadd [#allocation5], %s27
      %s29 = sshll.u32 [#allocation4], 4
      %s30 = int_to_ptr.vmem [resolvable:$true] %s29
      %35 = dma.hbm_to_vmem [thread:$0]  %s2, 6144, %s30, [#allocation5], 384, 384, 24
    $region13: #{tpu_custom_call.1} parent=1 // pred_fallthru
      _
    // Predicated region
    $region14: #{tpu_custom_call.1} parent=1 // pred_check
      _
    $region15: #{tpu_custom_call.1} parent=1 // pred_check_branch
      %37 = sbr.rel (0) target = $region17
    $region16: #{tpu_custom_call.1} parent=1 // pred_region
      _
    $region17: #{tpu_custom_call.1} parent=1 // pred_fallthru
      _
    // Predicated region
    $region18: #{tpu_custom_call.1} parent=1 // pred_check
      _
    $region19: #{tpu_custom_call.1} parent=1 // pred_check_branch
      %39 = sbr.rel (0) target = $region21
    $region20: #{tpu_custom_call.1} parent=1 // pred_region
      _
    $region21: #{tpu_custom_call.1} parent=1 // pred_fallthru
      _
    // Predicated region
    $region22: #{tpu_custom_call.1} parent=1 // pred_check
      _
    $region23: #{tpu_custom_call.1} parent=1 // pred_check_branch
      %41 = sbr.rel (0) target = $region25
    $region24: #{tpu_custom_call.1} parent=1 // pred_region
      %42 = dma.done [#allocation5], 6144
    $region25: #{tpu_custom_call.1} parent=1 // pred_fallthru
      _
    %s43 = sadd.s32 0, 0
    %s44 = smul.u32 8, %s43
    %p45 = scmp.lt.s32.totalorder %s44, 7
    %s46 = scalar_select %p45, %s44, 7
    %s47 = smul.addr %s46, 8
    %s48 = scalar_lea.vmem %s0, %s47
    %s49 = sadd.s32 0, 0
    %s50 = smul.u32 8, %s49
    %p51 = scmp.lt.s32.totalorder %s50, 7
    %s52 = scalar_select %p51, %s50, 7
    %s53 = smul.addr %s52, 8
    %s54 = scalar_lea.vmem %s0, %s53
    %s55 = sadd.s32 0, 0
    %s56 = smul.u32 8, %s55
    %p57 = scmp.eq.s32.totalorder 0, 0
    // Predicated region
    $region26: #{tpu_custom_call.1} parent=1 // pred_check
      %p58 = pneg %p57
    $region27: #{tpu_custom_call.1} parent=1 // pred_check_branch
      %60 = sbr.rel (%p58) target = $region29
    $region28: #{tpu_custom_call.1} parent=1 // pred_region
      %61 = vst [vmem:[#allocation3] sm:$0xff] 0.0
    $region29: #{tpu_custom_call.1} parent=1 // pred_fallthru
      _
    %v62 = vld [vmem:[%s54] sm:$0xff]
    %v63 = vld [vmem:[%s54 + $0x8] sm:$0xff]
    %v64 = vld [vmem:[%s54 + $0x10] sm:$0xff]
    %v65 = vld [vmem:[%s54 + $0x18] sm:$0xff]
    %v66 = vld [vmem:[%s54 + $0x20] sm:$0xff]
    %v67 = vld [vmem:[%s54 + $0x28] sm:$0xff]
    %v68 = vld [vmem:[%s54 + $0x30] sm:$0xff]
    %v69 = vld [vmem:[%s54 + $0x38] sm:$0xff]
    %v70 = vld [vmem:[%s1] sm:$0xff]
    %v71 = vld [vmem:[%s1 + $0x8] sm:$0xff]
    %v72 = vld [vmem:[%s1 + $0x10] sm:$0xff]
    %v73 = vld [vmem:[%s3] sm:$0x7]
    %v75 = vlaneseq
    %v76 = vshrl.u32 %v75, 7
    %v77 = vsub.s32 0, %v76
    %v78 = vrot.slane %v73, %v77
    %v79 = vlaneseq
    %v80 = vshrl.u32 %v79, 7
    %v81 = vsub.s32 1, %v80
    %v82 = vrot.slane %v73, %v81
    %v83 = vlaneseq
    %v84 = vshrl.u32 %v83, 7
    %v85 = vsub.s32 2, %v84
    %v86 = vrot.slane %v73, %v85
    %vm90 = vcmask 64512
    %v92 = vsel %vm90, %v62, 0
    %v95 = vsel %vm90, %v63, 0
    %v98 = vsel %vm90, %v64, 0
    %v101 = vsel %vm90, %v65, 0
    %v104 = vsel %vm90, %v66, 0
    %v107 = vsel %vm90, %v67, 0
    %v110 = vsel %vm90, %v68, 0
    %v113 = vsel %vm90, %v69, 0
    %115 = vmatprep.subr.mxu0 0.0
    %116 = vmatpush1.msra.mxu0 0.0
    %117 = vmatprep.subr.mxu0 0.0
    %118 = vmatpush1.msra.mxu0 0.0
    %119 = vmatprep.subr.mxu0 0.0
    %120 = vmatpush1.msra.mxu0 0.0
    %121 = vmatprep.subr.mxu0 0.0
    %122 = vmatpush1.msra.mxu0 0.0
    %123 = vmatprep.subr.mxu0 0.0
    %124 = vmatpush1.msra.mxu0 0.0
    %125 = vmatprep.subr.mxu0 0.0
    %126 = vmatpush1.msra.mxu0 0.0
    %127 = vmatprep.subr.mxu0 0.0
    %128 = vmatpush1.msra.mxu0 0.0
    %129 = vmatprep.subr.mxu0 0.0
    %130 = vmatpush1.msra.mxu0 0.0
    %131 = vmatprep.subr.mxu0 0.0
    %132 = vmatpush1.msra.mxu0 0.0
    %133 = vmatprep.subr.mxu0 0.0
    %134 = vmatpush1.msra.mxu0 0.0
    %135 = vmatprep.subr.mxu0 0.0
    %136 = vmatpush1.msra.mxu0 0.0
    %137 = vmatprep.subr.mxu0 0.0
    %138 = vmatpush1.msra.mxu0 0.0
    %139 = vmatprep.subr.mxu0 0.0
    %140 = vmatpush1.msra.mxu0 0.0
    %141 = vmatprep.subr.mxu0 0.0
    %142 = vmatpush1.msra.mxu0 0.0
    %143 = vmatprep.subr.mxu0 0.0
    %144 = vmatpush1.msra.mxu0 0.0
    %145 = vmatprep.subr.mxu0 %v71
    %146 = vmatpush1.msra.mxu0 %v70
    %147 = vmatprep.subr.mxu0 0.0
    %148 = vmatpush2.msra.mxu0 0.0
    %149 = vmatprep.subr.mxu0 0.0
    %150 = vmatpush2.msra.mxu0 0.0
    %151 = vmatprep.subr.mxu0 0.0
    %152 = vmatpush2.msra.mxu0 0.0
    %153 = vmatprep.subr.mxu0 0.0
    %154 = vmatpush2.msra.mxu0 0.0
    %155 = vmatprep.subr.mxu0 0.0
    %156 = vmatpush2.msra.mxu0 0.0
    %157 = vmatprep.subr.mxu0 0.0
    %158 = vmatpush2.msra.mxu0 0.0
    %159 = vmatprep.subr.mxu0 0.0
    %160 = vmatpush2.msra.mxu0 0.0
    %161 = vmatprep.subr.mxu0 0.0
    %162 = vmatpush2.msra.mxu0 0.0
    %163 = vmatprep.subr.mxu0 0.0
    %164 = vmatpush2.msra.mxu0 0.0
    %165 = vmatprep.subr.mxu0 0.0
    %166 = vmatpush2.msra.mxu0 0.0
    %167 = vmatprep.subr.mxu0 0.0
    %168 = vmatpush2.msra.mxu0 0.0
    %169 = vmatprep.subr.mxu0 0.0
    %170 = vmatpush2.msra.mxu0 0.0
    %171 = vmatprep.subr.mxu0 0.0
    %172 = vmatpush2.msra.mxu0 0.0
    %173 = vmatprep.subr.mxu0 0.0
    %174 = vmatpush2.msra.mxu0 0.0
    %175 = vmatprep.subr.mxu0 0.0
    %176 = vmatpush2.msra.mxu0 0.0
    %177 = vmatprep.subr.mxu0 0.0
    %178 = vmatpush2.msra.mxu0 0.0
    %179 = vmatprep.mubr.f32.mxu0 0.0
    %180 = vmatmul.mubr.f32.gmra.mxu0 %v92
    %v181 = vpop.f32.mrf.mxu0
    %v182 = vadd.f32 %v78, %v181
    %v183 = vpop.f32.mrf.mxu0
    %v184 = vadd.f32 %v82, %v183
    %185 = vmatprep.mubr.f32.mxu0 0.0
    %186 = vmatmul.mubr.f32.gmra.mxu0 %v95
    %v187 = vpop.f32.mrf.mxu0
    %v188 = vadd.f32 %v78, %v187
    %v189 = vpop.f32.mrf.mxu0
    %v190 = vadd.f32 %v82, %v189
    %191 = vmatprep.mubr.f32.mxu0 0.0
    %192 = vmatmul.mubr.f32.gmra.mxu0 %v98
    %v193 = vpop.f32.mrf.mxu0
    %v194 = vadd.f32 %v78, %v193
    %v195 = vpop.f32.mrf.mxu0
    %v196 = vadd.f32 %v82, %v195
    %197 = vmatprep.mubr.f32.mxu0 0.0
    %198 = vmatmul.mubr.f32.gmra.mxu0 %v101
    %v199 = vpop.f32.mrf.mxu0
    %v200 = vadd.f32 %v78, %v199
    %v201 = vpop.f32.mrf.mxu0
    %v202 = vadd.f32 %v82, %v201
    %203 = vmatprep.mubr.f32.mxu0 0.0
    %204 = vmatmul.mubr.f32.gmra.mxu0 %v104
    %v205 = vpop.f32.mrf.mxu0
    %v206 = vadd.f32 %v78, %v205
    %v207 = vpop.f32.mrf.mxu0
    %v208 = vadd.f32 %v82, %v207
    %209 = vmatprep.mubr.f32.mxu0 0.0
    %210 = vmatmul.mubr.f32.gmra.mxu0 %v107
    %v211 = vpop.f32.mrf.mxu0
    %v212 = vadd.f32 %v78, %v211
    %v213 = vpop.f32.mrf.mxu0
    %v214 = vadd.f32 %v82, %v213
    %215 = vmatprep.mubr.f32.mxu0 0.0
    %216 = vmatmul.mubr.f32.gmra.mxu0 %v110
    %v217 = vpop.f32.mrf.mxu0
    %v218 = vadd.f32 %v78, %v217
    %v219 = vpop.f32.mrf.mxu0
    %v220 = vadd.f32 %v82, %v219
    %221 = vmatprep.mubr.f32.mxu0 0.0
    %222 = vmatmul.mubr.f32.gmra.mxu0 %v113
    %v223 = vpop.f32.mrf.mxu0
    %v224 = vadd.f32 %v78, %v223
    %v225 = vpop.f32.mrf.mxu0
    %v226 = vadd.f32 %v82, %v225
    %227 = vdwg.mxu0
    %228 = vmatprep.subr.mxu0 0.0
    %229 = vmatpush1.msra.mxu0 0.0
    %230 = vmatprep.subr.mxu0 0.0
    %231 = vmatpush1.msra.mxu0 0.0
    %232 = vmatprep.subr.mxu0 0.0
    %233 = vmatpush1.msra.mxu0 0.0
    %234 = vmatprep.subr.mxu0 0.0
    %235 = vmatpush1.msra.mxu0 0.0
    %236 = vmatprep.subr.mxu0 0.0
    %237 = vmatpush1.msra.mxu0 0.0
    %238 = vmatprep.subr.mxu0 0.0
    %239 = vmatpush1.msra.mxu0 0.0
    %240 = vmatprep.subr.mxu0 0.0
    %241 = vmatpush1.msra.mxu0 0.0
    %242 = vmatprep.subr.mxu0 0.0
    %243 = vmatpush1.msra.mxu0 0.0
    %244 = vmatprep.subr.mxu0 0.0
    %245 = vmatpush1.msra.mxu0 0.0
    %246 = vmatprep.subr.mxu0 0.0
    %247 = vmatpush1.msra.mxu0 0.0
    %248 = vmatprep.subr.mxu0 0.0
    %249 = vmatpush1.msra.mxu0 0.0
    %250 = vmatprep.subr.mxu0 0.0
    %251 = vmatpush1.msra.mxu0 0.0
    %252 = vmatprep.subr.mxu0 0.0
    %253 = vmatpush1.msra.mxu0 0.0
    %254 = vmatprep.subr.mxu0 0.0
    %255 = vmatpush1.msra.mxu0 0.0
    %256 = vmatprep.subr.mxu0 0.0
    %257 = vmatpush1.msra.mxu0 0.0
    %258 = vmatprep.subr.mxu0 0.0
    %259 = vmatpush1.msra.mxu0 %v72
    %260 = vmatprep.subr.mxu0 0.0
    %261 = vmatpush2.msra.mxu0 0.0
    %262 = vmatprep.subr.mxu0 0.0
    %263 = vmatpush2.msra.mxu0 0.0
    %264 = vmatprep.subr.mxu0 0.0
    %265 = vmatpush2.msra.mxu0 0.0
    %266 = vmatprep.subr.mxu0 0.0
    %267 = vmatpush2.msra.mxu0 0.0
    %268 = vmatprep.subr.mxu0 0.0
    %269 = vmatpush2.msra.mxu0 0.0
    %270 = vmatprep.subr.mxu0 0.0
    %271 = vmatpush2.msra.mxu0 0.0
    %272 = vmatprep.subr.mxu0 0.0
    %273 = vmatpush2.msra.mxu0 0.0
    %274 = vmatprep.subr.mxu0 0.0
    %275 = vmatpush2.msra.mxu0 0.0
    %276 = vmatprep.subr.mxu0 0.0
    %277 = vmatpush2.msra.mxu0 0.0
    %278 = vmatprep.subr.mxu0 0.0
    %279 = vmatpush2.msra.mxu0 0.0
    %280 = vmatprep.subr.mxu0 0.0
    %281 = vmatpush2.msra.mxu0 0.0
    %282 = vmatprep.subr.mxu0 0.0
    %283 = vmatpush2.msra.mxu0 0.0
    %284 = vmatprep.subr.mxu0 0.0
    %285 = vmatpush2.msra.mxu0 0.0
    %286 = vmatprep.subr.mxu0 0.0
    %287 = vmatpush2.msra.mxu0 0.0
    %288 = vmatprep.subr.mxu0 0.0
    %289 = vmatpush2.msra.mxu0 0.0
    %290 = vmatprep.subr.mxu0 0.0
    %291 = vmatpush2.msra.mxu0 0.0
    %292 = vmatprep.mubr.f32.mxu0 0.0
    %293 = vmatmul.mubr.f32.gmra.mxu0 %v92
    %v294 = vpop.f32.mrf.mxu0
    %v295 = vadd.f32 %v86, %v294
    %v296 = vpop.f32.mrf.mxu0
    %297 = vmatprep.mubr.f32.mxu0 0.0
    %298 = vmatmul.mubr.f32.gmra.mxu0 %v95
    %v299 = vpop.f32.mrf.mxu0
    %v300 = vadd.f32 %v86, %v299
    %v301 = vpop.f32.mrf.mxu0
    %302 = vmatprep.mubr.f32.mxu0 0.0
    %303 = vmatmul.mubr.f32.gmra.mxu0 %v98
    %v304 = vpop.f32.mrf.mxu0
    %v305 = vadd.f32 %v86, %v304
    %v306 = vpop.f32.mrf.mxu0
    %307 = vmatprep.mubr.f32.mxu0 0.0
    %308 = vmatmul.mubr.f32.gmra.mxu0 %v101
    %v309 = vpop.f32.mrf.mxu0
    %v310 = vadd.f32 %v86, %v309
    %v311 = vpop.f32.mrf.mxu0
    %312 = vmatprep.mubr.f32.mxu0 0.0
    %313 = vmatmul.mubr.f32.gmra.mxu0 %v104
    %v314 = vpop.f32.mrf.mxu0
    %v315 = vadd.f32 %v86, %v314
    %v316 = vpop.f32.mrf.mxu0
    %317 = vmatprep.mubr.f32.mxu0 0.0
    %318 = vmatmul.mubr.f32.gmra.mxu0 %v107
    %v319 = vpop.f32.mrf.mxu0
    %v320 = vadd.f32 %v86, %v319
    %v321 = vpop.f32.mrf.mxu0
    %322 = vmatprep.mubr.f32.mxu0 0.0
    %323 = vmatmul.mubr.f32.gmra.mxu0 %v110
    %v324 = vpop.f32.mrf.mxu0
    %v325 = vadd.f32 %v86, %v324
    %v326 = vpop.f32.mrf.mxu0
    %327 = vmatprep.mubr.f32.mxu0 0.0
    %328 = vmatmul.mubr.f32.gmra.mxu0 %v113
    %v329 = vpop.f32.mrf.mxu0
    %v330 = vadd.f32 %v86, %v329
    %v331 = vpop.f32.mrf.mxu0
    %332 = vdwg.mxu0
    %333 = vst [vmem:[#allocation2] sm:$0xff] %v182
    %334 = vst [vmem:[#allocation2 + $0x8] sm:$0xff] %v184
    %335 = vst [vmem:[#allocation2 + $0x10] sm:$0xff] %v295
    %336 = vst [vmem:[#allocation2 + $0x18] sm:$0xff] %v188
    %337 = vst [vmem:[#allocation2 + $0x20] sm:$0xff] %v190
    %338 = vst [vmem:[#allocation2 + $0x28] sm:$0xff] %v300
    %339 = vst [vmem:[#allocation2 + $0x30] sm:$0xff] %v194
    %340 = vst [vmem:[#allocation2 + $0x38] sm:$0xff] %v196
    %341 = vst [vmem:[#allocation2 + $0x40] sm:$0xff] %v305
    %342 = vst [vmem:[#allocation2 + $0x48] sm:$0xff] %v200
    %343 = vst [vmem:[#allocation2 + $0x50] sm:$0xff] %v202
    %344 = vst [vmem:[#allocation2 + $0x58] sm:$0xff] %v310
    %345 = vst [vmem:[#allocation2 + $0x60] sm:$0xff] %v206
    %346 = vst [vmem:[#allocation2 + $0x68] sm:$0xff] %v208
    %347 = vst [vmem:[#allocation2 + $0x70] sm:$0xff] %v315
    %348 = vst [vmem:[#allocation2 + $0x78] sm:$0xff] %v212
    %349 = vst [vmem:[#allocation2 + $0x80] sm:$0xff] %v214
    %350 = vst [vmem:[#allocation2 + $0x88] sm:$0xff] %v320
    %351 = vst [vmem:[#allocation2 + $0x90] sm:$0xff] %v218
    %352 = vst [vmem:[#allocation2 + $0x98] sm:$0xff] %v220
    %353 = vst [vmem:[#allocation2 + $0xa0] sm:$0xff] %v325
    %354 = vst [vmem:[#allocation2 + $0xa8] sm:$0xff] %v224
    %355 = vst [vmem:[#allocation2 + $0xb0] sm:$0xff] %v226
    %356 = vst [vmem:[#allocation2 + $0xb8] sm:$0xff] %v330
    %v357 = vld [vmem:[#allocation4] sm:$0xff]
    %v358 = vld [vmem:[#allocation4 + $0x8] sm:$0xff]
    %v359 = vld [vmem:[#allocation4 + $0x10] sm:$0xff]
    %v360 = vld [vmem:[#allocation4 + $0x18] sm:$0xff]
    %v361 = vld [vmem:[#allocation4 + $0x20] sm:$0xff]
    %v362 = vld [vmem:[#allocation4 + $0x28] sm:$0xff]
    %v363 = vld [vmem:[#allocation4 + $0x30] sm:$0xff]
    %v364 = vld [vmem:[#allocation4 + $0x38] sm:$0xff]
    %v365 = vld [vmem:[#allocation4 + $0x40] sm:$0xff]
    %v366 = vld [vmem:[#allocation4 + $0x48] sm:$0xff]
    %v367 = vld [vmem:[#allocation4 + $0x50] sm:$0xff]
    %v368 = vld [vmem:[#allocation4 + $0x58] sm:$0xff]
    %v369 = vld [vmem:[#allocation4 + $0x60] sm:$0xff]
    %v370 = vld [vmem:[#allocation4 + $0x68] sm:$0xff]
    %v371 = vld [vmem:[#allocation4 + $0x70] sm:$0xff]
    %v372 = vld [vmem:[#allocation4 + $0x78] sm:$0xff]
    %v373 = vld [vmem:[#allocation4 + $0x80] sm:$0xff]
    %v374 = vld [vmem:[#allocation4 + $0x88] sm:$0xff]
    %v375 = vld [vmem:[#allocation4 + $0x90] sm:$0xff]
    %v376 = vld [vmem:[#allocation4 + $0x98] sm:$0xff]
    %v377 = vld [vmem:[#allocation4 + $0xa0] sm:$0xff]
    %v378 = vld [vmem:[#allocation4 + $0xa8] sm:$0xff]
    %v379 = vld [vmem:[#allocation4 + $0xb0] sm:$0xff]
    %v380 = vld [vmem:[#allocation4 + $0xb8] sm:$0xff]
    %v381 = vld [vmem:[#allocation4 + $0xc0] sm:$0xff]
    %v382 = vld [vmem:[#allocation4 + $0xc8] sm:$0xff]
    %v383 = vld [vmem:[#allocation4 + $0xd0] sm:$0xff]
    %v384 = vld [vmem:[#allocation4 + $0xd8] sm:$0xff]
    %v385 = vld [vmem:[#allocation4 + $0xe0] sm:$0xff]
    %v386 = vld [vmem:[#allocation4 + $0xe8] sm:$0xff]
    %v387 = vld [vmem:[#allocation4 + $0xf0] sm:$0xff]
    %v388 = vld [vmem:[#allocation4 + $0xf8] sm:$0xff]
    %v389 = vld [vmem:[#allocation4 + $0x100] sm:$0xff]
    %v390 = vld [vmem:[#allocation4 + $0x108] sm:$0xff]
    %v391 = vld [vmem:[#allocation4 + $0x110] sm:$0xff]
    %v392 = vld [vmem:[#allocation4 + $0x118] sm:$0xff]
    %v393 = vld [vmem:[#allocation4 + $0x120] sm:$0xff]
    %v394 = vld [vmem:[#allocation4 + $0x128] sm:$0xff]
    %v395 = vld [vmem:[#allocation4 + $0x130] sm:$0xff]
    %v396 = vld [vmem:[#allocation4 + $0x138] sm:$0xff]
    %v397 = vld [vmem:[#allocation4 + $0x140] sm:$0xff]
    %v398 = vld [vmem:[#allocation4 + $0x148] sm:$0xff]
    %v399 = vld [vmem:[#allocation4 + $0x150] sm:$0xff]
    %v400 = vld [vmem:[#allocation4 + $0x158] sm:$0xff]
    %v401 = vld [vmem:[#allocation4 + $0x160] sm:$0xff]
    %v402 = vld [vmem:[#allocation4 + $0x168] sm:$0xff]
    %v403 = vld [vmem:[#allocation4 + $0x170] sm:$0xff]
    %v404 = vld [vmem:[#allocation4 + $0x178] sm:$0xff]
    %v405 = vld [vmem:[%s4] sm:$0x1]
    %v407 = vlaneseq
    %v408 = vshrl.u32 %v407, 7
    %v409 = vsub.s32 0, %v408
    %v410 = vrot.slane %v405, %v409
    %v412 = vld [vmem:[#allocation3] sm:$0xff]
    %s413 = smul.u32 0, 3
    %s414 = smul.addr %s413, 8
    %s415 = scalar_lea.vmem [#allocation2], %s414
    %v416 = vld [vmem:[%s415] sm:$0xff]
    %v417 = vld [vmem:[%s415 + $0x8] sm:$0xff]
    %v418 = vld [vmem:[%s415 + $0x10] sm:$0xff]
    %419 = vmatprep.subr.mxu0 %v403
    %420 = vmatpush1.msra.mxu0 %v402
    %421 = vmatprep.subr.mxu0 %v400
    %422 = vmatpush1.msra.mxu0 %v399
    %423 = vmatprep.subr.mxu0 %v397
    %424 = vmatpush1.msra.mxu0 %v396
    %425 = vmatprep.subr.mxu0 %v394
    %426 = vmatpush1.msra.mxu0 %v393
    %427 = vmatprep.subr.mxu0 %v391
    %428 = vmatpush1.msra.mxu0 %v390
    %429 = vmatprep.subr.mxu0 %v388
    %430 = vmatpush1.msra.mxu0 %v387
    %431 = vmatprep.subr.mxu0 %v385
    %432 = vmatpush1.msra.mxu0 %v384
    %433 = vmatprep.subr.mxu0 %v382
    %434 = vmatpush1.msra.mxu0 %v381
    %435 = vmatprep.subr.mxu0 %v379
    %436 = vmatpush1.msra.mxu0 %v378
    %437 = vmatprep.subr.mxu0 %v376
    %438 = vmatpush1.msra.mxu0 %v375
    %439 = vmatprep.subr.mxu0 %v373
    %440 = vmatpush1.msra.mxu0 %v372
    %441 = vmatprep.subr.mxu0 %v370
    %442 = vmatpush1.msra.mxu0 %v369
    %443 = vmatprep.subr.mxu0 %v367
    %444 = vmatpush1.msra.mxu0 %v366
    %445 = vmatprep.subr.mxu0 %v364
    %446 = vmatpush1.msra.mxu0 %v363
    %447 = vmatprep.subr.mxu0 %v361
    %448 = vmatpush1.msra.mxu0 %v360
    %449 = vmatprep.subr.mxu0 %v358
    %450 = vmatpush1.msra.mxu0 %v357
    %451 = vmatprep.subr.mxu0 0.0
    %452 = vmatpush2.msra.mxu0 0.0
    %453 = vmatprep.subr.mxu0 0.0
    %454 = vmatpush2.msra.mxu0 0.0
    %455 = vmatprep.subr.mxu0 0.0
    %456 = vmatpush2.msra.mxu0 0.0
    %457 = vmatprep.subr.mxu0 0.0
    %458 = vmatpush2.msra.mxu0 0.0
    %459 = vmatprep.subr.mxu0 0.0
    %460 = vmatpush2.msra.mxu0 0.0
    %461 = vmatprep.subr.mxu0 0.0
    %462 = vmatpush2.msra.mxu0 0.0
    %463 = vmatprep.subr.mxu0 0.0
    %464 = vmatpush2.msra.mxu0 0.0
    %465 = vmatprep.subr.mxu0 0.0
    %466 = vmatpush2.msra.mxu0 0.0
    %467 = vmatprep.subr.mxu0 0.0
    %468 = vmatpush2.msra.mxu0 0.0
    %469 = vmatprep.subr.mxu0 0.0
    %470 = vmatpush2.msra.mxu0 0.0
    %471 = vmatprep.subr.mxu0 0.0
    %472 = vmatpush2.msra.mxu0 0.0
    %473 = vmatprep.subr.mxu0 0.0
    %474 = vmatpush2.msra.mxu0 0.0
    %475 = vmatprep.subr.mxu0 0.0
    %476 = vmatpush2.msra.mxu0 0.0
    %477 = vmatprep.subr.mxu0 0.0
    %478 = vmatpush2.msra.mxu0 0.0
    %479 = vmatprep.subr.mxu0 0.0
    %480 = vmatpush2.msra.mxu0 0.0
    %481 = vmatprep.subr.mxu0 0.0
    %482 = vmatpush2.msra.mxu0 0.0
    %483 = vmatprep.mubr.f32.mxu0 0.0
    %484 = vmatmul.mubr.f32.gmra.mxu0 %v412
    %v485 = vpop.f32.mrf.mxu0
    %v486 = vadd.f32 0.0, %v485
    %v487 = vpop.f32.mrf.mxu0
    %v488 = vadd.f32 0.0, %v487
    %489 = vdwg.mxu0
    %490 = vmatprep.subr.mxu0 0.0
    %491 = vmatpush1.msra.mxu0 %v404
    %492 = vmatprep.subr.mxu0 0.0
    %493 = vmatpush1.msra.mxu0 %v401
    %494 = vmatprep.subr.mxu0 0.0
    %495 = vmatpush1.msra.mxu0 %v398
    %496 = vmatprep.subr.mxu0 0.0
    %497 = vmatpush1.msra.mxu0 %v395
    %498 = vmatprep.subr.mxu0 0.0
    %499 = vmatpush1.msra.mxu0 %v392
    %500 = vmatprep.subr.mxu0 0.0
    %501 = vmatpush1.msra.mxu0 %v389
    %502 = vmatprep.subr.mxu0 0.0
    %503 = vmatpush1.msra.mxu0 %v386
    %504 = vmatprep.subr.mxu0 0.0
    %505 = vmatpush1.msra.mxu0 %v383
    %506 = vmatprep.subr.mxu0 0.0
    %507 = vmatpush1.msra.mxu0 %v380
    %508 = vmatprep.subr.mxu0 0.0
    %509 = vmatpush1.msra.mxu0 %v377
    %510 = vmatprep.subr.mxu0 0.0
    %511 = vmatpush1.msra.mxu0 %v374
    %512 = vmatprep.subr.mxu0 0.0
    %513 = vmatpush1.msra.mxu0 %v371
    %514 = vmatprep.subr.mxu0 0.0
    %515 = vmatpush1.msra.mxu0 %v368
    %516 = vmatprep.subr.mxu0 0.0
    %517 = vmatpush1.msra.mxu0 %v365
    %518 = vmatprep.subr.mxu0 0.0
    %519 = vmatpush1.msra.mxu0 %v362
    %520 = vmatprep.subr.mxu0 0.0
    %521 = vmatpush1.msra.mxu0 %v359
    %522 = vmatprep.subr.mxu0 0.0
    %523 = vmatpush2.msra.mxu0 0.0
    %524 = vmatprep.subr.mxu0 0.0
    %525 = vmatpush2.msra.mxu0 0.0
    %526 = vmatprep.subr.mxu0 0.0
    %527 = vmatpush2.msra.mxu0 0.0
    %528 = vmatprep.subr.mxu0 0.0
    %529 = vmatpush2.msra.mxu0 0.0
    %530 = vmatprep.subr.mxu0 0.0
    %531 = vmatpush2.msra.mxu0 0.0
    %532 = vmatprep.subr.mxu0 0.0
    %533 = vmatpush2.msra.mxu0 0.0
    %534 = vmatprep.subr.mxu0 0.0
    %535 = vmatpush2.msra.mxu0 0.0
    %536 = vmatprep.subr.mxu0 0.0
    %537 = vmatpush2.msra.mxu0 0.0
    %538 = vmatprep.subr.mxu0 0.0
    %539 = vmatpush2.msra.mxu0 0.0
    %540 = vmatprep.subr.mxu0 0.0
    %541 = vmatpush2.msra.mxu0 0.0
    %542 = vmatprep.subr.mxu0 0.0
    %543 = vmatpush2.msra.mxu0 0.0
    %544 = vmatprep.subr.mxu0 0.0
    %545 = vmatpush2.msra.mxu0 0.0
    %546 = vmatprep.subr.mxu0 0.0
    %547 = vmatpush2.msra.mxu0 0.0
    %548 = vmatprep.subr.mxu0 0.0
    %549 = vmatpush2.msra.mxu0 0.0
    %550 = vmatprep.subr.mxu0 0.0
    %551 = vmatpush2.msra.mxu0 0.0
    %552 = vmatprep.subr.mxu0 0.0
    %553 = vmatpush2.msra.mxu0 0.0
    %554 = vmatprep.mubr.f32.mxu0 0.0
    %555 = vmatmul.mubr.f32.gmra.mxu0 %v412
    %v556 = vpop.f32.mrf.mxu0
    %v557 = vadd.f32 0.0, %v556
    %v558 = vpop.f32.mrf.mxu0
    %559 = vdwg.mxu0
    %v560 = vadd.f32 %v416, %v486
    %v561 = vxor.u32 %v560, 2147483648
    %v562 = vmul.f32 %v561, 1.442695
    %v563 = vpow.pop %v562
    %v564 = vadd.f32 %v563, 1.0
    %v565 = vrcp.pop %v564
    %v566 = vmul.f32 1.0, %v565
    %v567 = vadd.f32 %v417, %v488
    %v568 = vxor.u32 %v567, 2147483648
    %v569 = vmul.f32 %v568, 1.442695
    %v570 = vpow.pop %v569
    %v571 = vadd.f32 %v570, 1.0
    %v572 = vrcp.pop %v571
    %v573 = vmul.f32 1.0, %v572
    %v574 = vadd.f32 %v557, %v410
    %v575 = vmul.f32 %v566, %v574
    %v576 = vadd.f32 %v418, %v575
    %v577 = vtanh.pop %v576
    %v578 = vsub.f32 1.0, %v573
    %v579 = vmul.f32 %v578, %v577
    %v580 = vmul.f32 %v573, %v412
    %v581 = vadd.f32 %v579, %v580
    %s582 = smul.u32 1, 3
    %s583 = smul.addr %s582, 8
    %s584 = scalar_lea.vmem [#allocation2], %s583
    %v585 = vld [vmem:[%s584] sm:$0xff]
    %v586 = vld [vmem:[%s584 + $0x8] sm:$0xff]
    %v587 = vld [vmem:[%s584 + $0x10] sm:$0xff]
    %588 = vmatprep.subr.mxu0 %v403
    %589 = vmatpush1.msra.mxu0 %v402
    %590 = vmatprep.subr.mxu0 %v400
    %591 = vmatpush1.msra.mxu0 %v399
    %592 = vmatprep.subr.mxu0 %v397
    %593 = vmatpush1.msra.mxu0 %v396
    %594 = vmatprep.subr.mxu0 %v394
    %595 = vmatpush1.msra.mxu0 %v393
    %596 = vmatprep.subr.mxu0 %v391
    %597 = vmatpush1.msra.mxu0 %v390
    %598 = vmatprep.subr.mxu0 %v388
    %599 = vmatpush1.msra.mxu0 %v387
    %600 = vmatprep.subr.mxu0 %v385
    %601 = vmatpush1.msra.mxu0 %v384
    %602 = vmatprep.subr.mxu0 %v382
    %603 = vmatpush1.msra.mxu0 %v381
    %604 = vmatprep.subr.mxu0 %v379
    %605 = vmatpush1.msra.mxu0 %v378
    %606 = vmatprep.subr.mxu0 %v376
    %607 = vmatpush1.msra.mxu0 %v375
    %608 = vmatprep.subr.mxu0 %v373
    %609 = vmatpush1.msra.mxu0 %v372
    %610 = vmatprep.subr.mxu0 %v370
    %611 = vmatpush1.msra.mxu0 %v369
    %612 = vmatprep.subr.mxu0 %v367
    %613 = vmatpush1.msra.mxu0 %v366
    %614 = vmatprep.subr.mxu0 %v364
    %615 = vmatpush1.msra.mxu0 %v363
    %616 = vmatprep.subr.mxu0 %v361
    %617 = vmatpush1.msra.mxu0 %v360
    %618 = vmatprep.subr.mxu0 %v358
    %619 = vmatpush1.msra.mxu0 %v357
    %620 = vmatprep.subr.mxu0 0.0
    %621 = vmatpush2.msra.mxu0 0.0
    %622 = vmatprep.subr.mxu0 0.0
    %623 = vmatpush2.msra.mxu0 0.0
    %624 = vmatprep.subr.mxu0 0.0
    %625 = vmatpush2.msra.mxu0 0.0
    %626 = vmatprep.subr.mxu0 0.0
    %627 = vmatpush2.msra.mxu0 0.0
    %628 = vmatprep.subr.mxu0 0.0
    %629 = vmatpush2.msra.mxu0 0.0
    %630 = vmatprep.subr.mxu0 0.0
    %631 = vmatpush2.msra.mxu0 0.0
    %632 = vmatprep.subr.mxu0 0.0
    %633 = vmatpush2.msra.mxu0 0.0
    %634 = vmatprep.subr.mxu0 0.0
    %635 = vmatpush2.msra.mxu0 0.0
    %636 = vmatprep.subr.mxu0 0.0
    %637 = vmatpush2.msra.mxu0 0.0
    %638 = vmatprep.subr.mxu0 0.0
    %639 = vmatpush2.msra.mxu0 0.0
    %640 = vmatprep.subr.mxu0 0.0
    %641 = vmatpush2.msra.mxu0 0.0
    %642 = vmatprep.subr.mxu0 0.0
    %643 = vmatpush2.msra.mxu0 0.0
    %644 = vmatprep.subr.mxu0 0.0
    %645 = vmatpush2.msra.mxu0 0.0
    %646 = vmatprep.subr.mxu0 0.0
    %647 = vmatpush2.msra.mxu0 0.0
    %648 = vmatprep.subr.mxu0 0.0
    %649 = vmatpush2.msra.mxu0 0.0
    %650 = vmatprep.subr.mxu0 0.0
    %651 = vmatpush2.msra.mxu0 0.0
    %652 = vmatprep.mubr.f32.mxu0 0.0
    %653 = vmatmul.mubr.f32.gmra.mxu0 %v581
    %v654 = vpop.f32.mrf.mxu0
    %v655 = vadd.f32 0.0, %v654
    %v656 = vpop.f32.mrf.mxu0
    %v657 = vadd.f32 0.0, %v656
    %658 = vdwg.mxu0
    %659 = vmatprep.subr.mxu0 0.0
    %660 = vmatpush1.msra.mxu0 %v404
    %661 = vmatprep.subr.mxu0 0.0
    %662 = vmatpush1.msra.mxu0 %v401
    %663 = vmatprep.subr.mxu0 0.0
    %664 = vmatpush1.msra.mxu0 %v398
    %665 = vmatprep.subr.mxu0 0.0
    %666 = vmatpush1.msra.mxu0 %v395
    %667 = vmatprep.subr.mxu0 0.0
    %668 = vmatpush1.msra.mxu0 %v392
    %669 = vmatprep.subr.mxu0 0.0
    %670 = vmatpush1.msra.mxu0 %v389
    %671 = vmatprep.subr.mxu0 0.0
    %672 = vmatpush1.msra.mxu0 %v386
    %673 = vmatprep.subr.mxu0 0.0
    %674 = vmatpush1.msra.mxu0 %v383
    %675 = vmatprep.subr.mxu0 0.0
    %676 = vmatpush1.msra.mxu0 %v380
    %677 = vmatprep.subr.mxu0 0.0
    %678 = vmatpush1.msra.mxu0 %v377
    %679 = vmatprep.subr.mxu0 0.0
    %680 = vmatpush1.msra.mxu0 %v374
    %681 = vmatprep.subr.mxu0 0.0
    %682 = vmatpush1.msra.mxu0 %v371
    %683 = vmatprep.subr.mxu0 0.0
    %684 = vmatpush1.msra.mxu0 %v368
    %685 = vmatprep.subr.mxu0 0.0
    %686 = vmatpush1.msra.mxu0 %v365
    %687 = vmatprep.subr.mxu0 0.0
    %688 = vmatpush1.msra.mxu0 %v362
    %689 = vmatprep.subr.mxu0 0.0
    %690 = vmatpush1.msra.mxu0 %v359
    %691 = vmatprep.subr.mxu0 0.0
    %692 = vmatpush2.msra.mxu0 0.0
    %693 = vmatprep.subr.mxu0 0.0
    %694 = vmatpush2.msra.mxu0 0.0
    %695 = vmatprep.subr.mxu0 0.0
    %696 = vmatpush2.msra.mxu0 0.0
    %697 = vmatprep.subr.mxu0 0.0
    %698 = vmatpush2.msra.mxu0 0.0
    %699 = vmatprep.subr.mxu0 0.0
    %700 = vmatpush2.msra.mxu0 0.0
    %701 = vmatprep.subr.mxu0 0.0
    %702 = vmatpush2.msra.mxu0 0.0
    %703 = vmatprep.subr.mxu0 0.0
    %704 = vmatpush2.msra.mxu0 0.0
    %705 = vmatprep.subr.mxu0 0.0
    %706 = vmatpush2.msra.mxu0 0.0
    %707 = vmatprep.subr.mxu0 0.0
    %708 = vmatpush2.msra.mxu0 0.0
    %709 = vmatprep.subr.mxu0 0.0
    %710 = vmatpush2.msra.mxu0 0.0
    %711 = vmatprep.subr.mxu0 0.0
    %712 = vmatpush2.msra.mxu0 0.0
    %713 = vmatprep.subr.mxu0 0.0
    %714 = vmatpush2.msra.mxu0 0.0
    %715 = vmatprep.subr.mxu0 0.0
    %716 = vmatpush2.msra.mxu0 0.0
    %717 = vmatprep.subr.mxu0 0.0
    %718 = vmatpush2.msra.mxu0 0.0
    %719 = vmatprep.subr.mxu0 0.0
    %720 = vmatpush2.msra.mxu0 0.0
    %721 = vmatprep.subr.mxu0 0.0
    %722 = vmatpush2.msra.mxu0 0.0
    %723 = vmatprep.mubr.f32.mxu0 0.0
    %724 = vmatmul.mubr.f32.gmra.mxu0 %v581
    %v725 = vpop.f32.mrf.mxu0
    %v726 = vadd.f32 0.0, %v725
    %v727 = vpop.f32.mrf.mxu0
    %728 = vdwg.mxu0
    %v729 = vadd.f32 %v585, %v655
    %v730 = vxor.u32 %v729, 2147483648
    %v731 = vmul.f32 %v730, 1.442695
    %v732 = vpow.pop %v731
    %v733 = vadd.f32 %v732, 1.0
    %v734 = vrcp.pop %v733
    %v735 = vmul.f32 1.0, %v734
    %v736 = vadd.f32 %v586, %v657
    %v737 = vxor.u32 %v736, 2147483648
    %v738 = vmul.f32 %v737, 1.442695
    %v739 = vpow.pop %v738
    %v740 = vadd.f32 %v739, 1.0
    %v741 = vrcp.pop %v740
    %v742 = vmul.f32 1.0, %v741
    %v743 = vadd.f32 %v726, %v410
    %v744 = vmul.f32 %v735, %v743
    %v745 = vadd.f32 %v587, %v744
    %v746 = vtanh.pop %v745
    %v747 = vsub.f32 1.0, %v742
    %v748 = vmul.f32 %v747, %v746
    %v749 = vmul.f32 %v742, %v581
    %v750 = vadd.f32 %v748, %v749
    %s751 = smul.u32 2, 3
    %s752 = smul.addr %s751, 8
    %s753 = scalar_lea.vmem [#allocation2], %s752
    %v754 = vld [vmem:[%s753] sm:$0xff]
    %v755 = vld [vmem:[%s753 + $0x8] sm:$0xff]
    %v756 = vld [vmem:[%s753 + $0x10] sm:$0xff]
    %757 = vmatprep.subr.mxu0 %v403
    %758 = vmatpush1.msra.mxu0 %v402
    %759 = vmatprep.subr.mxu0 %v400
    %760 = vmatpush1.msra.mxu0 %v399
    %761 = vmatprep.subr.mxu0 %v397
    %762 = vmatpush1.msra.mxu0 %v396
    %763 = vmatprep.subr.mxu0 %v394
    %764 = vmatpush1.msra.mxu0 %v393
    %765 = vmatprep.subr.mxu0 %v391
    %766 = vmatpush1.msra.mxu0 %v390
    %767 = vmatprep.subr.mxu0 %v388
    %768 = vmatpush1.msra.mxu0 %v387
    %769 = vmatprep.subr.mxu0 %v385
    %770 = vmatpush1.msra.mxu0 %v384
    %771 = vmatprep.subr.mxu0 %v382
    %772 = vmatpush1.msra.mxu0 %v381
    %773 = vmatprep.subr.mxu0 %v379
    %774 = vmatpush1.msra.mxu0 %v378
    %775 = vmatprep.subr.mxu0 %v376
    %776 = vmatpush1.msra.mxu0 %v375
    %777 = vmatprep.subr.mxu0 %v373
    %778 = vmatpush1.msra.mxu0 %v372
    %779 = vmatprep.subr.mxu0 %v370
    %780 = vmatpush1.msra.mxu0 %v369
    %781 = vmatprep.subr.mxu0 %v367
    %782 = vmatpush1.msra.mxu0 %v366
    %783 = vmatprep.subr.mxu0 %v364
    %784 = vmatpush1.msra.mxu0 %v363
    %785 = vmatprep.subr.mxu0 %v361
    %786 = vmatpush1.msra.mxu0 %v360
    %787 = vmatprep.subr.mxu0 %v358
    %788 = vmatpush1.msra.mxu0 %v357
    %789 = vmatprep.subr.mxu0 0.0
    %790 = vmatpush2.msra.mxu0 0.0
    %791 = vmatprep.subr.mxu0 0.0
    %792 = vmatpush2.msra.mxu0 0.0
    %793 = vmatprep.subr.mxu0 0.0
    %794 = vmatpush2.msra.mxu0 0.0
    %795 = vmatprep.subr.mxu0 0.0
    %796 = vmatpush2.msra.mxu0 0.0
    %797 = vmatprep.subr.mxu0 0.0
    %798 = vmatpush2.msra.mxu0 0.0
    %799 = vmatprep.subr.mxu0 0.0
    %800 = vmatpush2.msra.mxu0 0.0
    %801 = vmatprep.subr.mxu0 0.0
    %802 = vmatpush2.msra.mxu0 0.0
    %803 = vmatprep.subr.mxu0 0.0
    %804 = vmatpush2.msra.mxu0 0.0
    %805 = vmatprep.subr.mxu0 0.0
    %806 = vmatpush2.msra.mxu0 0.0
    %807 = vmatprep.subr.mxu0 0.0
    %808 = vmatpush2.msra.mxu0 0.0
    %809 = vmatprep.subr.mxu0 0.0
    %810 = vmatpush2.msra.mxu0 0.0
    %811 = vmatprep.subr.mxu0 0.0
    %812 = vmatpush2.msra.mxu0 0.0
    %813 = vmatprep.subr.mxu0 0.0
    %814 = vmatpush2.msra.mxu0 0.0
    %815 = vmatprep.subr.mxu0 0.0
    %816 = vmatpush2.msra.mxu0 0.0
    %817 = vmatprep.subr.mxu0 0.0
    %818 = vmatpush2.msra.mxu0 0.0
    %819 = vmatprep.subr.mxu0 0.0
    %820 = vmatpush2.msra.mxu0 0.0
    %821 = vmatprep.mubr.f32.mxu0 0.0
    %822 = vmatmul.mubr.f32.gmra.mxu0 %v750
    %v823 = vpop.f32.mrf.mxu0
    %v824 = vadd.f32 0.0, %v823
    %v825 = vpop.f32.mrf.mxu0
    %v826 = vadd.f32 0.0, %v825
    %827 = vdwg.mxu0
    %828 = vmatprep.subr.mxu0 0.0
    %829 = vmatpush1.msra.mxu0 %v404
    %830 = vmatprep.subr.mxu0 0.0
    %831 = vmatpush1.msra.mxu0 %v401
    %832 = vmatprep.subr.mxu0 0.0
    %833 = vmatpush1.msra.mxu0 %v398
    %834 = vmatprep.subr.mxu0 0.0
    %835 = vmatpush1.msra.mxu0 %v395
    %836 = vmatprep.subr.mxu0 0.0
    %837 = vmatpush1.msra.mxu0 %v392
    %838 = vmatprep.subr.mxu0 0.0
    %839 = vmatpush1.msra.mxu0 %v389
    %840 = vmatprep.subr.mxu0 0.0
    %841 = vmatpush1.msra.mxu0 %v386
    %842 = vmatprep.subr.mxu0 0.0
    %843 = vmatpush1.msra.mxu0 %v383
    %844 = vmatprep.subr.mxu0 0.0
    %845 = vmatpush1.msra.mxu0 %v380
    %846 = vmatprep.subr.mxu0 0.0
    %847 = vmatpush1.msra.mxu0 %v377
    %848 = vmatprep.subr.mxu0 0.0
    %849 = vmatpush1.msra.mxu0 %v374
    %850 = vmatprep.subr.mxu0 0.0
    %851 = vmatpush1.msra.mxu0 %v371
    %852 = vmatprep.subr.mxu0 0.0
    %853 = vmatpush1.msra.mxu0 %v368
    %854 = vmatprep.subr.mxu0 0.0
    %855 = vmatpush1.msra.mxu0 %v365
    %856 = vmatprep.subr.mxu0 0.0
    %857 = vmatpush1.msra.mxu0 %v362
    %858 = vmatprep.subr.mxu0 0.0
    %859 = vmatpush1.msra.mxu0 %v359
    %860 = vmatprep.subr.mxu0 0.0
    %861 = vmatpush2.msra.mxu0 0.0
    %862 = vmatprep.subr.mxu0 0.0
    %863 = vmatpush2.msra.mxu0 0.0
    %864 = vmatprep.subr.mxu0 0.0
    %865 = vmatpush2.msra.mxu0 0.0
    %866 = vmatprep.subr.mxu0 0.0
    %867 = vmatpush2.msra.mxu0 0.0
    %868 = vmatprep.subr.mxu0 0.0
    %869 = vmatpush2.msra.mxu0 0.0
    %870 = vmatprep.subr.mxu0 0.0
    %871 = vmatpush2.msra.mxu0 0.0
    %872 = vmatprep.subr.mxu0 0.0
    %873 = vmatpush2.msra.mxu0 0.0
    %874 = vmatprep.subr.mxu0 0.0
    %875 = vmatpush2.msra.mxu0 0.0
    %876 = vmatprep.subr.mxu0 0.0
    %877 = vmatpush2.msra.mxu0 0.0
    %878 = vmatprep.subr.mxu0 0.0
    %879 = vmatpush2.msra.mxu0 0.0
    %880 = vmatprep.subr.mxu0 0.0
    %881 = vmatpush2.msra.mxu0 0.0
    %882 = vmatprep.subr.mxu0 0.0
    %883 = vmatpush2.msra.mxu0 0.0
    %884 = vmatprep.subr.mxu0 0.0
    %885 = vmatpush2.msra.mxu0 0.0
    %886 = vmatprep.subr.mxu0 0.0
    %887 = vmatpush2.msra.mxu0 0.0
    %888 = vmatprep.subr.mxu0 0.0
    %889 = vmatpush2.msra.mxu0 0.0
    %890 = vmatprep.subr.mxu0 0.0
    %891 = vmatpush2.msra.mxu0 0.0
    %892 = vmatprep.mubr.f32.mxu0 0.0
    %893 = vmatmul.mubr.f32.gmra.mxu0 %v750
    %v894 = vpop.f32.mrf.mxu0
    %v895 = vadd.f32 0.0, %v894
    %v896 = vpop.f32.mrf.mxu0
    %897 = vdwg.mxu0
    %v898 = vadd.f32 %v754, %v824
    %v899 = vxor.u32 %v898, 2147483648
    %v900 = vmul.f32 %v899, 1.442695
    %v901 = vpow.pop %v900
    %v902 = vadd.f32 %v901, 1.0
    %v903 = vrcp.pop %v902
    %v904 = vmul.f32 1.0, %v903
    %v905 = vadd.f32 %v755, %v826
    %v906 = vxor.u32 %v905, 2147483648
    %v907 = vmul.f32 %v906, 1.442695
    %v908 = vpow.pop %v907
    %v909 = vadd.f32 %v908, 1.0
    %v910 = vrcp.pop %v909
    %v911 = vmul.f32 1.0, %v910
    %v912 = vadd.f32 %v895, %v410
    %v913 = vmul.f32 %v904, %v912
    %v914 = vadd.f32 %v756, %v913
    %v915 = vtanh.pop %v914
    %v916 = vsub.f32 1.0, %v911
    %v917 = vmul.f32 %v916, %v915
    %v918 = vmul.f32 %v911, %v750
    %v919 = vadd.f32 %v917, %v918
    %s920 = smul.u32 3, 3
    %s921 = smul.addr %s920, 8
    %s922 = scalar_lea.vmem [#allocation2], %s921
    %v923 = vld [vmem:[%s922] sm:$0xff]
    %v924 = vld [vmem:[%s922 + $0x8] sm:$0xff]
    %v925 = vld [vmem:[%s922 + $0x10] sm:$0xff]
    %926 = vmatprep.subr.mxu0 %v403
    %927 = vmatpush1.msra.mxu0 %v402
    %928 = vmatprep.subr.mxu0 %v400
    %929 = vmatpush1.msra.mxu0 %v399
    %930 = vmatprep.subr.mxu0 %v397
    %931 = vmatpush1.msra.mxu0 %v396
    %932 = vmatprep.subr.mxu0 %v394
    %933 = vmatpush1.msra.mxu0 %v393
    %934 = vmatprep.subr.mxu0 %v391
    %935 = vmatpush1.msra.mxu0 %v390
    %936 = vmatprep.subr.mxu0 %v388
    %937 = vmatpush1.msra.mxu0 %v387
    %938 = vmatprep.subr.mxu0 %v385
    %939 = vmatpush1.msra.mxu0 %v384
    %940 = vmatprep.subr.mxu0 %v382
    %941 = vmatpush1.msra.mxu0 %v381
    %942 = vmatprep.subr.mxu0 %v379
    %943 = vmatpush1.msra.mxu0 %v378
    %944 = vmatprep.subr.mxu0 %v376
    %945 = vmatpush1.msra.mxu0 %v375
    %946 = vmatprep.subr.mxu0 %v373
    %947 = vmatpush1.msra.mxu0 %v372
    %948 = vmatprep.subr.mxu0 %v370
    %949 = vmatpush1.msra.mxu0 %v369
    %950 = vmatprep.subr.mxu0 %v367
    %951 = vmatpush1.msra.mxu0 %v366
    %952 = vmatprep.subr.mxu0 %v364
    %953 = vmatpush1.msra.mxu0 %v363
    %954 = vmatprep.subr.mxu0 %v361
    %955 = vmatpush1.msra.mxu0 %v360
    %956 = vmatprep.subr.mxu0 %v358
    %957 = vmatpush1.msra.mxu0 %v357
    %958 = vmatprep.subr.mxu0 0.0
    %959 = vmatpush2.msra.mxu0 0.0
    %960 = vmatprep.subr.mxu0 0.0
    %961 = vmatpush2.msra.mxu0 0.0
    %962 = vmatprep.subr.mxu0 0.0
    %963 = vmatpush2.msra.mxu0 0.0
    %964 = vmatprep.subr.mxu0 0.0
    %965 = vmatpush2.msra.mxu0 0.0
    %966 = vmatprep.subr.mxu0 0.0
    %967 = vmatpush2.msra.mxu0 0.0
    %968 = vmatprep.subr.mxu0 0.0
    %969 = vmatpush2.msra.mxu0 0.0
    %970 = vmatprep.subr.mxu0 0.0
    %971 = vmatpush2.msra.mxu0 0.0
    %972 = vmatprep.subr.mxu0 0.0
    %973 = vmatpush2.msra.mxu0 0.0
    %974 = vmatprep.subr.mxu0 0.0
    %975 = vmatpush2.msra.mxu0 0.0
    %976 = vmatprep.subr.mxu0 0.0
    %977 = vmatpush2.msra.mxu0 0.0
    %978 = vmatprep.subr.mxu0 0.0
    %979 = vmatpush2.msra.mxu0 0.0
    %980 = vmatprep.subr.mxu0 0.0
    %981 = vmatpush2.msra.mxu0 0.0
    %982 = vmatprep.subr.mxu0 0.0
    %983 = vmatpush2.msra.mxu0 0.0
    %984 = vmatprep.subr.mxu0 0.0
    %985 = vmatpush2.msra.mxu0 0.0
    %986 = vmatprep.subr.mxu0 0.0
    %987 = vmatpush2.msra.mxu0 0.0
    %988 = vmatprep.subr.mxu0 0.0
    %989 = vmatpush2.msra.mxu0 0.0
    %990 = vmatprep.mubr.f32.mxu0 0.0
    %991 = vmatmul.mubr.f32.gmra.mxu0 %v919
    %v992 = vpop.f32.mrf.mxu0
    %v993 = vadd.f32 0.0, %v992
    %v994 = vpop.f32.mrf.mxu0
    %v995 = vadd.f32 0.0, %v994
    %996 = vdwg.mxu0
    %997 = vmatprep.subr.mxu0 0.0
    %998 = vmatpush1.msra.mxu0 %v404
    %999 = vmatprep.subr.mxu0 0.0
    %1000 = vmatpush1.msra.mxu0 %v401
    %1001 = vmatprep.subr.mxu0 0.0
    %1002 = vmatpush1.msra.mxu0 %v398
    %1003 = vmatprep.subr.mxu0 0.0
    %1004 = vmatpush1.msra.mxu0 %v395
    %1005 = vmatprep.subr.mxu0 0.0
    %1006 = vmatpush1.msra.mxu0 %v392
    %1007 = vmatprep.subr.mxu0 0.0
    %1008 = vmatpush1.msra.mxu0 %v389
    %1009 = vmatprep.subr.mxu0 0.0
    %1010 = vmatpush1.msra.mxu0 %v386
    %1011 = vmatprep.subr.mxu0 0.0
    %1012 = vmatpush1.msra.mxu0 %v383
    %1013 = vmatprep.subr.mxu0 0.0
    %1014 = vmatpush1.msra.mxu0 %v380
    %1015 = vmatprep.subr.mxu0 0.0
    %1016 = vmatpush1.msra.mxu0 %v377
    %1017 = vmatprep.subr.mxu0 0.0
    %1018 = vmatpush1.msra.mxu0 %v374
    %1019 = vmatprep.subr.mxu0 0.0
    %1020 = vmatpush1.msra.mxu0 %v371
    %1021 = vmatprep.subr.mxu0 0.0
    %1022 = vmatpush1.msra.mxu0 %v368
    %1023 = vmatprep.subr.mxu0 0.0
    %1024 = vmatpush1.msra.mxu0 %v365
    %1025 = vmatprep.subr.mxu0 0.0
    %1026 = vmatpush1.msra.mxu0 %v362
    %1027 = vmatprep.subr.mxu0 0.0
    %1028 = vmatpush1.msra.mxu0 %v359
    %1029 = vmatprep.subr.mxu0 0.0
    %1030 = vmatpush2.msra.mxu0 0.0
    %1031 = vmatprep.subr.mxu0 0.0
    %1032 = vmatpush2.msra.mxu0 0.0
    %1033 = vmatprep.subr.mxu0 0.0
    %1034 = vmatpush2.msra.mxu0 0.0
    %1035 = vmatprep.subr.mxu0 0.0
    %1036 = vmatpush2.msra.mxu0 0.0
    %1037 = vmatprep.subr.mxu0 0.0
    %1038 = vmatpush2.msra.mxu0 0.0
    %1039 = vmatprep.subr.mxu0 0.0
    %1040 = vmatpush2.msra.mxu0 0.0
    %1041 = vmatprep.subr.mxu0 0.0
    %1042 = vmatpush2.msra.mxu0 0.0
    %1043 = vmatprep.subr.mxu0 0.0
    %1044 = vmatpush2.msra.mxu0 0.0
    %1045 = vmatprep.subr.mxu0 0.0
    %1046 = vmatpush2.msra.mxu0 0.0
    %1047 = vmatprep.subr.mxu0 0.0
    %1048 = vmatpush2.msra.mxu0 0.0
    %1049 = vmatprep.subr.mxu0 0.0
    %1050 = vmatpush2.msra.mxu0 0.0
    %1051 = vmatprep.subr.mxu0 0.0
    %1052 = vmatpush2.msra.mxu0 0.0
    %1053 = vmatprep.subr.mxu0 0.0
    %1054 = vmatpush2.msra.mxu0 0.0
    %1055 = vmatprep.subr.mxu0 0.0
    %1056 = vmatpush2.msra.mxu0 0.0
    %1057 = vmatprep.subr.mxu0 0.0
    %1058 = vmatpush2.msra.mxu0 0.0
    %1059 = vmatprep.subr.mxu0 0.0
    %1060 = vmatpush2.msra.mxu0 0.0
    %1061 = vmatprep.mubr.f32.mxu0 0.0
    %1062 = vmatmul.mubr.f32.gmra.mxu0 %v919
    %v1063 = vpop.f32.mrf.mxu0
    %v1064 = vadd.f32 0.0, %v1063
    %v1065 = vpop.f32.mrf.mxu0
    %1066 = vdwg.mxu0
    %v1067 = vadd.f32 %v923, %v993
    %v1068 = vxor.u32 %v1067, 2147483648
    %v1069 = vmul.f32 %v1068, 1.442695
    %v1070 = vpow.pop %v1069
    %v1071 = vadd.f32 %v1070, 1.0
    %v1072 = vrcp.pop %v1071
    %v1073 = vmul.f32 1.0, %v1072
    %v1074 = vadd.f32 %v924, %v995
    %v1075 = vxor.u32 %v1074, 2147483648
    %v1076 = vmul.f32 %v1075, 1.442695
    %v1077 = vpow.pop %v1076
    %v1078 = vadd.f32 %v1077, 1.0
    %v1079 = vrcp.pop %v1078
    %v1080 = vmul.f32 1.0, %v1079
    %v1081 = vadd.f32 %v1064, %v410
    %v1082 = vmul.f32 %v1073, %v1081
    %v1083 = vadd.f32 %v925, %v1082
    %v1084 = vtanh.pop %v1083
    %v1085 = vsub.f32 1.0, %v1080
    %v1086 = vmul.f32 %v1085, %v1084
    %v1087 = vmul.f32 %v1080, %v919
    %v1088 = vadd.f32 %v1086, %v1087
    %s1089 = smul.u32 4, 3
    %s1090 = smul.addr %s1089, 8
    %s1091 = scalar_lea.vmem [#allocation2], %s1090
    %v1092 = vld [vmem:[%s1091] sm:$0xff]
    %v1093 = vld [vmem:[%s1091 + $0x8] sm:$0xff]
    %v1094 = vld [vmem:[%s1091 + $0x10] sm:$0xff]
    %1095 = vmatprep.subr.mxu0 %v403
    %1096 = vmatpush1.msra.mxu0 %v402
    %1097 = vmatprep.subr.mxu0 %v400
    %1098 = vmatpush1.msra.mxu0 %v399
    %1099 = vmatprep.subr.mxu0 %v397
    %1100 = vmatpush1.msra.mxu0 %v396
    %1101 = vmatprep.subr.mxu0 %v394
    %1102 = vmatpush1.msra.mxu0 %v393
    %1103 = vmatprep.subr.mxu0 %v391
    %1104 = vmatpush1.msra.mxu0 %v390
    %1105 = vmatprep.subr.mxu0 %v388
    %1106 = vmatpush1.msra.mxu0 %v387
    %1107 = vmatprep.subr.mxu0 %v385
    %1108 = vmatpush1.msra.mxu0 %v384
    %1109 = vmatprep.subr.mxu0 %v382
    %1110 = vmatpush1.msra.mxu0 %v381
    %1111 = vmatprep.subr.mxu0 %v379
    %1112 = vmatpush1.msra.mxu0 %v378
    %1113 = vmatprep.subr.mxu0 %v376
    %1114 = vmatpush1.msra.mxu0 %v375
    %1115 = vmatprep.subr.mxu0 %v373
    %1116 = vmatpush1.msra.mxu0 %v372
    %1117 = vmatprep.subr.mxu0 %v370
    %1118 = vmatpush1.msra.mxu0 %v369
    %1119 = vmatprep.subr.mxu0 %v367
    %1120 = vmatpush1.msra.mxu0 %v366
    %1121 = vmatprep.subr.mxu0 %v364
    %1122 = vmatpush1.msra.mxu0 %v363
    %1123 = vmatprep.subr.mxu0 %v361
    %1124 = vmatpush1.msra.mxu0 %v360
    %1125 = vmatprep.subr.mxu0 %v358
    %1126 = vmatpush1.msra.mxu0 %v357
    %1127 = vmatprep.subr.mxu0 0.0
    %1128 = vmatpush2.msra.mxu0 0.0
    %1129 = vmatprep.subr.mxu0 0.0
    %1130 = vmatpush2.msra.mxu0 0.0
    %1131 = vmatprep.subr.mxu0 0.0
    %1132 = vmatpush2.msra.mxu0 0.0
    %1133 = vmatprep.subr.mxu0 0.0
    %1134 = vmatpush2.msra.mxu0 0.0
    %1135 = vmatprep.subr.mxu0 0.0
    %1136 = vmatpush2.msra.mxu0 0.0
    %1137 = vmatprep.subr.mxu0 0.0
    %1138 = vmatpush2.msra.mxu0 0.0
    %1139 = vmatprep.subr.mxu0 0.0
    %1140 = vmatpush2.msra.mxu0 0.0
    %1141 = vmatprep.subr.mxu0 0.0
    %1142 = vmatpush2.msra.mxu0 0.0
    %1143 = vmatprep.subr.mxu0 0.0
    %1144 = vmatpush2.msra.mxu0 0.0
    %1145 = vmatprep.subr.mxu0 0.0
    %1146 = vmatpush2.msra.mxu0 0.0
    %1147 = vmatprep.subr.mxu0 0.0
    %1148 = vmatpush2.msra.mxu0 0.0
    %1149 = vmatprep.subr.mxu0 0.0
    %1150 = vmatpush2.msra.mxu0 0.0
    %1151 = vmatprep.subr.mxu0 0.0
    %1152 = vmatpush2.msra.mxu0 0.0
    %1153 = vmatprep.subr.mxu0 0.0
    %1154 = vmatpush2.msra.mxu0 0.0
    %1155 = vmatprep.subr.mxu0 0.0
    %1156 = vmatpush2.msra.mxu0 0.0
    %1157 = vmatprep.subr.mxu0 0.0
    %1158 = vmatpush2.msra.mxu0 0.0
    %1159 = vmatprep.mubr.f32.mxu0 0.0
    %1160 = vmatmul.mubr.f32.gmra.mxu0 %v1088
    %v1161 = vpop.f32.mrf.mxu0
    %v1162 = vadd.f32 0.0, %v1161
    %v1163 = vpop.f32.mrf.mxu0
    %v1164 = vadd.f32 0.0, %v1163
    %1165 = vdwg.mxu0
    %1166 = vmatprep.subr.mxu0 0.0
    %1167 = vmatpush1.msra.mxu0 %v404
    %1168 = vmatprep.subr.mxu0 0.0
    %1169 = vmatpush1.msra.mxu0 %v401
    %1170 = vmatprep.subr.mxu0 0.0
    %1171 = vmatpush1.msra.mxu0 %v398
    %1172 = vmatprep.subr.mxu0 0.0
    %1173 = vmatpush1.msra.mxu0 %v395
    %1174 = vmatprep.subr.mxu0 0.0
    %1175 = vmatpush1.msra.mxu0 %v392
    %1176 = vmatprep.subr.mxu0 0.0
    %1177 = vmatpush1.msra.mxu0 %v389
    %1178 = vmatprep.subr.mxu0 0.0
    %1179 = vmatpush1.msra.mxu0 %v386
    %1180 = vmatprep.subr.mxu0 0.0
    %1181 = vmatpush1.msra.mxu0 %v383
    %1182 = vmatprep.subr.mxu0 0.0
    %1183 = vmatpush1.msra.mxu0 %v380
    %1184 = vmatprep.subr.mxu0 0.0
    %1185 = vmatpush1.msra.mxu0 %v377
    %1186 = vmatprep.subr.mxu0 0.0
    %1187 = vmatpush1.msra.mxu0 %v374
    %1188 = vmatprep.subr.mxu0 0.0
    %1189 = vmatpush1.msra.mxu0 %v371
    %1190 = vmatprep.subr.mxu0 0.0
    %1191 = vmatpush1.msra.mxu0 %v368
    %1192 = vmatprep.subr.mxu0 0.0
    %1193 = vmatpush1.msra.mxu0 %v365
    %1194 = vmatprep.subr.mxu0 0.0
    %1195 = vmatpush1.msra.mxu0 %v362
    %1196 = vmatprep.subr.mxu0 0.0
    %1197 = vmatpush1.msra.mxu0 %v359
    %1198 = vmatprep.subr.mxu0 0.0
    %1199 = vmatpush2.msra.mxu0 0.0
    %1200 = vmatprep.subr.mxu0 0.0
    %1201 = vmatpush2.msra.mxu0 0.0
    %1202 = vmatprep.subr.mxu0 0.0
    %1203 = vmatpush2.msra.mxu0 0.0
    %1204 = vmatprep.subr.mxu0 0.0
    %1205 = vmatpush2.msra.mxu0 0.0
    %1206 = vmatprep.subr.mxu0 0.0
    %1207 = vmatpush2.msra.mxu0 0.0
    %1208 = vmatprep.subr.mxu0 0.0
    %1209 = vmatpush2.msra.mxu0 0.0
    %1210 = vmatprep.subr.mxu0 0.0
    %1211 = vmatpush2.msra.mxu0 0.0
    %1212 = vmatprep.subr.mxu0 0.0
    %1213 = vmatpush2.msra.mxu0 0.0
    %1214 = vmatprep.subr.mxu0 0.0
    %1215 = vmatpush2.msra.mxu0 0.0
    %1216 = vmatprep.subr.mxu0 0.0
    %1217 = vmatpush2.msra.mxu0 0.0
    %1218 = vmatprep.subr.mxu0 0.0
    %1219 = vmatpush2.msra.mxu0 0.0
    %1220 = vmatprep.subr.mxu0 0.0
    %1221 = vmatpush2.msra.mxu0 0.0
    %1222 = vmatprep.subr.mxu0 0.0
    %1223 = vmatpush2.msra.mxu0 0.0
    %1224 = vmatprep.subr.mxu0 0.0
    %1225 = vmatpush2.msra.mxu0 0.0
    %1226 = vmatprep.subr.mxu0 0.0
    %1227 = vmatpush2.msra.mxu0 0.0
    %1228 = vmatprep.subr.mxu0 0.0
    %1229 = vmatpush2.msra.mxu0 0.0
    %1230 = vmatprep.mubr.f32.mxu0 0.0
    %1231 = vmatmul.mubr.f32.gmra.mxu0 %v1088
    %v1232 = vpop.f32.mrf.mxu0
    %v1233 = vadd.f32 0.0, %v1232
    %v1234 = vpop.f32.mrf.mxu0
    %1235 = vdwg.mxu0
    %v1236 = vadd.f32 %v1092, %v1162
    %v1237 = vxor.u32 %v1236, 2147483648
    %v1238 = vmul.f32 %v1237, 1.442695
    %v1239 = vpow.pop %v1238
    %v1240 = vadd.f32 %v1239, 1.0
    %v1241 = vrcp.pop %v1240
    %v1242 = vmul.f32 1.0, %v1241
    %v1243 = vadd.f32 %v1093, %v1164
    %v1244 = vxor.u32 %v1243, 2147483648
    %v1245 = vmul.f32 %v1244, 1.442695
    %v1246 = vpow.pop %v1245
    %v1247 = vadd.f32 %v1246, 1.0
    %v1248 = vrcp.pop %v1247
    %v1249 = vmul.f32 1.0, %v1248
    %v1250 = vadd.f32 %v1233, %v410
    %v1251 = vmul.f32 %v1242, %v1250
    %v1252 = vadd.f32 %v1094, %v1251
    %v1253 = vtanh.pop %v1252
    %v1254 = vsub.f32 1.0, %v1249
    %v1255 = vmul.f32 %v1254, %v1253
    %v1256 = vmul.f32 %v1249, %v1088
    %v1257 = vadd.f32 %v1255, %v1256
    %s1258 = smul.u32 5, 3
    %s1259 = smul.addr %s1258, 8
    %s1260 = scalar_lea.vmem [#allocation2], %s1259
    %v1261 = vld [vmem:[%s1260] sm:$0xff]
    %v1262 = vld [vmem:[%s1260 + $0x8] sm:$0xff]
    %v1263 = vld [vmem:[%s1260 + $0x10] sm:$0xff]
    %1264 = vmatprep.subr.mxu0 %v403
    %1265 = vmatpush1.msra.mxu0 %v402
    %1266 = vmatprep.subr.mxu0 %v400
    %1267 = vmatpush1.msra.mxu0 %v399
    %1268 = vmatprep.subr.mxu0 %v397
    %1269 = vmatpush1.msra.mxu0 %v396
    %1270 = vmatprep.subr.mxu0 %v394
    %1271 = vmatpush1.msra.mxu0 %v393
    %1272 = vmatprep.subr.mxu0 %v391
    %1273 = vmatpush1.msra.mxu0 %v390
    %1274 = vmatprep.subr.mxu0 %v388
    %1275 = vmatpush1.msra.mxu0 %v387
    %1276 = vmatprep.subr.mxu0 %v385
    %1277 = vmatpush1.msra.mxu0 %v384
    %1278 = vmatprep.subr.mxu0 %v382
    %1279 = vmatpush1.msra.mxu0 %v381
    %1280 = vmatprep.subr.mxu0 %v379
    %1281 = vmatpush1.msra.mxu0 %v378
    %1282 = vmatprep.subr.mxu0 %v376
    %1283 = vmatpush1.msra.mxu0 %v375
    %1284 = vmatprep.subr.mxu0 %v373
    %1285 = vmatpush1.msra.mxu0 %v372
    %1286 = vmatprep.subr.mxu0 %v370
    %1287 = vmatpush1.msra.mxu0 %v369
    %1288 = vmatprep.subr.mxu0 %v367
    %1289 = vmatpush1.msra.mxu0 %v366
    %1290 = vmatprep.subr.mxu0 %v364
    %1291 = vmatpush1.msra.mxu0 %v363
    %1292 = vmatprep.subr.mxu0 %v361
    %1293 = vmatpush1.msra.mxu0 %v360
    %1294 = vmatprep.subr.mxu0 %v358
    %1295 = vmatpush1.msra.mxu0 %v357
    %1296 = vmatprep.subr.mxu0 0.0
    %1297 = vmatpush2.msra.mxu0 0.0
    %1298 = vmatprep.subr.mxu0 0.0
    %1299 = vmatpush2.msra.mxu0 0.0
    %1300 = vmatprep.subr.mxu0 0.0
    %1301 = vmatpush2.msra.mxu0 0.0
    %1302 = vmatprep.subr.mxu0 0.0
    %1303 = vmatpush2.msra.mxu0 0.0
    %1304 = vmatprep.subr.mxu0 0.0
    %1305 = vmatpush2.msra.mxu0 0.0
    %1306 = vmatprep.subr.mxu0 0.0
    %1307 = vmatpush2.msra.mxu0 0.0
    %1308 = vmatprep.subr.mxu0 0.0
    %1309 = vmatpush2.msra.mxu0 0.0
    %1310 = vmatprep.subr.mxu0 0.0
    %1311 = vmatpush2.msra.mxu0 0.0
    %1312 = vmatprep.subr.mxu0 0.0
    %1313 = vmatpush2.msra.mxu0 0.0
    %1314 = vmatprep.subr.mxu0 0.0
    %1315 = vmatpush2.msra.mxu0 0.0
    %1316 = vmatprep.subr.mxu0 0.0
    %1317 = vmatpush2.msra.mxu0 0.0
    %1318 = vmatprep.subr.mxu0 0.0
    %1319 = vmatpush2.msra.mxu0 0.0
    %1320 = vmatprep.subr.mxu0 0.0
    %1321 = vmatpush2.msra.mxu0 0.0
    %1322 = vmatprep.subr.mxu0 0.0
    %1323 = vmatpush2.msra.mxu0 0.0
    %1324 = vmatprep.subr.mxu0 0.0
    %1325 = vmatpush2.msra.mxu0 0.0
    %1326 = vmatprep.subr.mxu0 0.0
    %1327 = vmatpush2.msra.mxu0 0.0
    %1328 = vmatprep.mubr.f32.mxu0 0.0
    %1329 = vmatmul.mubr.f32.gmra.mxu0 %v1257
    %v1330 = vpop.f32.mrf.mxu0
    %v1331 = vadd.f32 0.0, %v1330
    %v1332 = vpop.f32.mrf.mxu0
    %v1333 = vadd.f32 0.0, %v1332
    %1334 = vdwg.mxu0
    %1335 = vmatprep.subr.mxu0 0.0
    %1336 = vmatpush1.msra.mxu0 %v404
    %1337 = vmatprep.subr.mxu0 0.0
    %1338 = vmatpush1.msra.mxu0 %v401
    %1339 = vmatprep.subr.mxu0 0.0
    %1340 = vmatpush1.msra.mxu0 %v398
    %1341 = vmatprep.subr.mxu0 0.0
    %1342 = vmatpush1.msra.mxu0 %v395
    %1343 = vmatprep.subr.mxu0 0.0
    %1344 = vmatpush1.msra.mxu0 %v392
    %1345 = vmatprep.subr.mxu0 0.0
    %1346 = vmatpush1.msra.mxu0 %v389
    %1347 = vmatprep.subr.mxu0 0.0
    %1348 = vmatpush1.msra.mxu0 %v386
    %1349 = vmatprep.subr.mxu0 0.0
    %1350 = vmatpush1.msra.mxu0 %v383
    %1351 = vmatprep.subr.mxu0 0.0
    %1352 = vmatpush1.msra.mxu0 %v380
    %1353 = vmatprep.subr.mxu0 0.0
    %1354 = vmatpush1.msra.mxu0 %v377
    %1355 = vmatprep.subr.mxu0 0.0
    %1356 = vmatpush1.msra.mxu0 %v374
    %1357 = vmatprep.subr.mxu0 0.0
    %1358 = vmatpush1.msra.mxu0 %v371
    %1359 = vmatprep.subr.mxu0 0.0
    %1360 = vmatpush1.msra.mxu0 %v368
    %1361 = vmatprep.subr.mxu0 0.0
    %1362 = vmatpush1.msra.mxu0 %v365
    %1363 = vmatprep.subr.mxu0 0.0
    %1364 = vmatpush1.msra.mxu0 %v362
    %1365 = vmatprep.subr.mxu0 0.0
    %1366 = vmatpush1.msra.mxu0 %v359
    %1367 = vmatprep.subr.mxu0 0.0
    %1368 = vmatpush2.msra.mxu0 0.0
    %1369 = vmatprep.subr.mxu0 0.0
    %1370 = vmatpush2.msra.mxu0 0.0
    %1371 = vmatprep.subr.mxu0 0.0
    %1372 = vmatpush2.msra.mxu0 0.0
    %1373 = vmatprep.subr.mxu0 0.0
    %1374 = vmatpush2.msra.mxu0 0.0
    %1375 = vmatprep.subr.mxu0 0.0
    %1376 = vmatpush2.msra.mxu0 0.0
    %1377 = vmatprep.subr.mxu0 0.0
    %1378 = vmatpush2.msra.mxu0 0.0
    %1379 = vmatprep.subr.mxu0 0.0
    %1380 = vmatpush2.msra.mxu0 0.0
    %1381 = vmatprep.subr.mxu0 0.0
    %1382 = vmatpush2.msra.mxu0 0.0
    %1383 = vmatprep.subr.mxu0 0.0
    %1384 = vmatpush2.msra.mxu0 0.0
    %1385 = vmatprep.subr.mxu0 0.0
    %1386 = vmatpush2.msra.mxu0 0.0
    %1387 = vmatprep.subr.mxu0 0.0
    %1388 = vmatpush2.msra.mxu0 0.0
    %1389 = vmatprep.subr.mxu0 0.0
    %1390 = vmatpush2.msra.mxu0 0.0
    %1391 = vmatprep.subr.mxu0 0.0
    %1392 = vmatpush2.msra.mxu0 0.0
    %1393 = vmatprep.subr.mxu0 0.0
    %1394 = vmatpush2.msra.mxu0 0.0
    %1395 = vmatprep.subr.mxu0 0.0
    %1396 = vmatpush2.msra.mxu0 0.0
    %1397 = vmatprep.subr.mxu0 0.0
    %1398 = vmatpush2.msra.mxu0 0.0
    %1399 = vmatprep.mubr.f32.mxu0 0.0
    %1400 = vmatmul.mubr.f32.gmra.mxu0 %v1257
    %v1401 = vpop.f32.mrf.mxu0
    %v1402 = vadd.f32 0.0, %v1401
    %v1403 = vpop.f32.mrf.mxu0
    %1404 = vdwg.mxu0
    %v1405 = vadd.f32 %v1261, %v1331
    %v1406 = vxor.u32 %v1405, 2147483648
    %v1407 = vmul.f32 %v1406, 1.442695
    %v1408 = vpow.pop %v1407
    %v1409 = vadd.f32 %v1408, 1.0
    %v1410 = vrcp.pop %v1409
    %v1411 = vmul.f32 1.0, %v1410
    %v1412 = vadd.f32 %v1262, %v1333
    %v1413 = vxor.u32 %v1412, 2147483648
    %v1414 = vmul.f32 %v1413, 1.442695
    %v1415 = vpow.pop %v1414
    %v1416 = vadd.f32 %v1415, 1.0
    %v1417 = vrcp.pop %v1416
    %v1418 = vmul.f32 1.0, %v1417
    %v1419 = vadd.f32 %v1402, %v410
    %v1420 = vmul.f32 %v1411, %v1419
    %v1421 = vadd.f32 %v1263, %v1420
    %v1422 = vtanh.pop %v1421
    %v1423 = vsub.f32 1.0, %v1418
    %v1424 = vmul.f32 %v1423, %v1422
    %v1425 = vmul.f32 %v1418, %v1257
    %v1426 = vadd.f32 %v1424, %v1425
    %s1427 = smul.u32 6, 3
    %s1428 = smul.addr %s1427, 8
    %s1429 = scalar_lea.vmem [#allocation2], %s1428
    %v1430 = vld [vmem:[%s1429] sm:$0xff]
    %v1431 = vld [vmem:[%s1429 + $0x8] sm:$0xff]
    %v1432 = vld [vmem:[%s1429 + $0x10] sm:$0xff]
    %1433 = vmatprep.subr.mxu0 %v403
    %1434 = vmatpush1.msra.mxu0 %v402
    %1435 = vmatprep.subr.mxu0 %v400
    %1436 = vmatpush1.msra.mxu0 %v399
    %1437 = vmatprep.subr.mxu0 %v397
    %1438 = vmatpush1.msra.mxu0 %v396
    %1439 = vmatprep.subr.mxu0 %v394
    %1440 = vmatpush1.msra.mxu0 %v393
    %1441 = vmatprep.subr.mxu0 %v391
    %1442 = vmatpush1.msra.mxu0 %v390
    %1443 = vmatprep.subr.mxu0 %v388
    %1444 = vmatpush1.msra.mxu0 %v387
    %1445 = vmatprep.subr.mxu0 %v385
    %1446 = vmatpush1.msra.mxu0 %v384
    %1447 = vmatprep.subr.mxu0 %v382
    %1448 = vmatpush1.msra.mxu0 %v381
    %1449 = vmatprep.subr.mxu0 %v379
    %1450 = vmatpush1.msra.mxu0 %v378
    %1451 = vmatprep.subr.mxu0 %v376
    %1452 = vmatpush1.msra.mxu0 %v375
    %1453 = vmatprep.subr.mxu0 %v373
    %1454 = vmatpush1.msra.mxu0 %v372
    %1455 = vmatprep.subr.mxu0 %v370
    %1456 = vmatpush1.msra.mxu0 %v369
    %1457 = vmatprep.subr.mxu0 %v367
    %1458 = vmatpush1.msra.mxu0 %v366
    %1459 = vmatprep.subr.mxu0 %v364
    %1460 = vmatpush1.msra.mxu0 %v363
    %1461 = vmatprep.subr.mxu0 %v361
    %1462 = vmatpush1.msra.mxu0 %v360
    %1463 = vmatprep.subr.mxu0 %v358
    %1464 = vmatpush1.msra.mxu0 %v357
    %1465 = vmatprep.subr.mxu0 0.0
    %1466 = vmatpush2.msra.mxu0 0.0
    %1467 = vmatprep.subr.mxu0 0.0
    %1468 = vmatpush2.msra.mxu0 0.0
    %1469 = vmatprep.subr.mxu0 0.0
    %1470 = vmatpush2.msra.mxu0 0.0
    %1471 = vmatprep.subr.mxu0 0.0
    %1472 = vmatpush2.msra.mxu0 0.0
    %1473 = vmatprep.subr.mxu0 0.0
    %1474 = vmatpush2.msra.mxu0 0.0
    %1475 = vmatprep.subr.mxu0 0.0
    %1476 = vmatpush2.msra.mxu0 0.0
    %1477 = vmatprep.subr.mxu0 0.0
    %1478 = vmatpush2.msra.mxu0 0.0
    %1479 = vmatprep.subr.mxu0 0.0
    %1480 = vmatpush2.msra.mxu0 0.0
    %1481 = vmatprep.subr.mxu0 0.0
    %1482 = vmatpush2.msra.mxu0 0.0
    %1483 = vmatprep.subr.mxu0 0.0
    %1484 = vmatpush2.msra.mxu0 0.0
    %1485 = vmatprep.subr.mxu0 0.0
    %1486 = vmatpush2.msra.mxu0 0.0
    %1487 = vmatprep.subr.mxu0 0.0
    %1488 = vmatpush2.msra.mxu0 0.0
    %1489 = vmatprep.subr.mxu0 0.0
    %1490 = vmatpush2.msra.mxu0 0.0
    %1491 = vmatprep.subr.mxu0 0.0
    %1492 = vmatpush2.msra.mxu0 0.0
    %1493 = vmatprep.subr.mxu0 0.0
    %1494 = vmatpush2.msra.mxu0 0.0
    %1495 = vmatprep.subr.mxu0 0.0
    %1496 = vmatpush2.msra.mxu0 0.0
    %1497 = vmatprep.mubr.f32.mxu0 0.0
    %1498 = vmatmul.mubr.f32.gmra.mxu0 %v1426
    %v1499 = vpop.f32.mrf.mxu0
    %v1500 = vadd.f32 0.0, %v1499
    %v1501 = vpop.f32.mrf.mxu0
    %v1502 = vadd.f32 0.0, %v1501
    %1503 = vdwg.mxu0
    %1504 = vmatprep.subr.mxu0 0.0
    %1505 = vmatpush1.msra.mxu0 %v404
    %1506 = vmatprep.subr.mxu0 0.0
    %1507 = vmatpush1.msra.mxu0 %v401
    %1508 = vmatprep.subr.mxu0 0.0
    %1509 = vmatpush1.msra.mxu0 %v398
    %1510 = vmatprep.subr.mxu0 0.0
    %1511 = vmatpush1.msra.mxu0 %v395
    %1512 = vmatprep.subr.mxu0 0.0
    %1513 = vmatpush1.msra.mxu0 %v392
    %1514 = vmatprep.subr.mxu0 0.0
    %1515 = vmatpush1.msra.mxu0 %v389
    %1516 = vmatprep.subr.mxu0 0.0
    %1517 = vmatpush1.msra.mxu0 %v386
    %1518 = vmatprep.subr.mxu0 0.0
    %1519 = vmatpush1.msra.mxu0 %v383
    %1520 = vmatprep.subr.mxu0 0.0
    %1521 = vmatpush1.msra.mxu0 %v380
    %1522 = vmatprep.subr.mxu0 0.0
    %1523 = vmatpush1.msra.mxu0 %v377
    %1524 = vmatprep.subr.mxu0 0.0
    %1525 = vmatpush1.msra.mxu0 %v374
    %1526 = vmatprep.subr.mxu0 0.0
    %1527 = vmatpush1.msra.mxu0 %v371
    %1528 = vmatprep.subr.mxu0 0.0
    %1529 = vmatpush1.msra.mxu0 %v368
    %1530 = vmatprep.subr.mxu0 0.0
    %1531 = vmatpush1.msra.mxu0 %v365
    %1532 = vmatprep.subr.mxu0 0.0
    %1533 = vmatpush1.msra.mxu0 %v362
    %1534 = vmatprep.subr.mxu0 0.0
    %1535 = vmatpush1.msra.mxu0 %v359
    %1536 = vmatprep.subr.mxu0 0.0
    %1537 = vmatpush2.msra.mxu0 0.0
    %1538 = vmatprep.subr.mxu0 0.0
    %1539 = vmatpush2.msra.mxu0 0.0
    %1540 = vmatprep.subr.mxu0 0.0
    %1541 = vmatpush2.msra.mxu0 0.0
    %1542 = vmatprep.subr.mxu0 0.0
    %1543 = vmatpush2.msra.mxu0 0.0
    %1544 = vmatprep.subr.mxu0 0.0
    %1545 = vmatpush2.msra.mxu0 0.0
    %1546 = vmatprep.subr.mxu0 0.0
    %1547 = vmatpush2.msra.mxu0 0.0
    %1548 = vmatprep.subr.mxu0 0.0
    %1549 = vmatpush2.msra.mxu0 0.0
    %1550 = vmatprep.subr.mxu0 0.0
    %1551 = vmatpush2.msra.mxu0 0.0
    %1552 = vmatprep.subr.mxu0 0.0
    %1553 = vmatpush2.msra.mxu0 0.0
    %1554 = vmatprep.subr.mxu0 0.0
    %1555 = vmatpush2.msra.mxu0 0.0
    %1556 = vmatprep.subr.mxu0 0.0
    %1557 = vmatpush2.msra.mxu0 0.0
    %1558 = vmatprep.subr.mxu0 0.0
    %1559 = vmatpush2.msra.mxu0 0.0
    %1560 = vmatprep.subr.mxu0 0.0
    %1561 = vmatpush2.msra.mxu0 0.0
    %1562 = vmatprep.subr.mxu0 0.0
    %1563 = vmatpush2.msra.mxu0 0.0
    %1564 = vmatprep.subr.mxu0 0.0
    %1565 = vmatpush2.msra.mxu0 0.0
    %1566 = vmatprep.subr.mxu0 0.0
    %1567 = vmatpush2.msra.mxu0 0.0
    %1568 = vmatprep.mubr.f32.mxu0 0.0
    %1569 = vmatmul.mubr.f32.gmra.mxu0 %v1426
    %v1570 = vpop.f32.mrf.mxu0
    %v1571 = vadd.f32 0.0, %v1570
    %v1572 = vpop.f32.mrf.mxu0
    %1573 = vdwg.mxu0
    %v1574 = vadd.f32 %v1430, %v1500
    %v1575 = vxor.u32 %v1574, 2147483648
    %v1576 = vmul.f32 %v1575, 1.442695
    %v1577 = vpow.pop %v1576
    %v1578 = vadd.f32 %v1577, 1.0
    %v1579 = vrcp.pop %v1578
    %v1580 = vmul.f32 1.0, %v1579
    %v1581 = vadd.f32 %v1431, %v1502
    %v1582 = vxor.u32 %v1581, 2147483648
    %v1583 = vmul.f32 %v1582, 1.442695
    %v1584 = vpow.pop %v1583
    %v1585 = vadd.f32 %v1584, 1.0
    %v1586 = vrcp.pop %v1585
    %v1587 = vmul.f32 1.0, %v1586
    %v1588 = vadd.f32 %v1571, %v410
    %v1589 = vmul.f32 %v1580, %v1588
    %v1590 = vadd.f32 %v1432, %v1589
    %v1591 = vtanh.pop %v1590
    %v1592 = vsub.f32 1.0, %v1587
    %v1593 = vmul.f32 %v1592, %v1591
    %v1594 = vmul.f32 %v1587, %v1426
    %v1595 = vadd.f32 %v1593, %v1594
    %s1596 = smul.u32 7, 3
    %s1597 = smul.addr %s1596, 8
    %s1598 = scalar_lea.vmem [#allocation2], %s1597
    %v1599 = vld [vmem:[%s1598] sm:$0xff]
    %v1600 = vld [vmem:[%s1598 + $0x8] sm:$0xff]
    %v1601 = vld [vmem:[%s1598 + $0x10] sm:$0xff]
    %1602 = vmatprep.subr.mxu0 %v403
    %1603 = vmatpush1.msra.mxu0 %v402
    %1604 = vmatprep.subr.mxu0 %v400
    %1605 = vmatpush1.msra.mxu0 %v399
    %1606 = vmatprep.subr.mxu0 %v397
    %1607 = vmatpush1.msra.mxu0 %v396
    %1608 = vmatprep.subr.mxu0 %v394
    %1609 = vmatpush1.msra.mxu0 %v393
    %1610 = vmatprep.subr.mxu0 %v391
    %1611 = vmatpush1.msra.mxu0 %v390
    %1612 = vmatprep.subr.mxu0 %v388
    %1613 = vmatpush1.msra.mxu0 %v387
    %1614 = vmatprep.subr.mxu0 %v385
    %1615 = vmatpush1.msra.mxu0 %v384
    %1616 = vmatprep.subr.mxu0 %v382
    %1617 = vmatpush1.msra.mxu0 %v381
    %1618 = vmatprep.subr.mxu0 %v379
    %1619 = vmatpush1.msra.mxu0 %v378
    %1620 = vmatprep.subr.mxu0 %v376
    %1621 = vmatpush1.msra.mxu0 %v375
    %1622 = vmatprep.subr.mxu0 %v373
    %1623 = vmatpush1.msra.mxu0 %v372
    %1624 = vmatprep.subr.mxu0 %v370
    %1625 = vmatpush1.msra.mxu0 %v369
    %1626 = vmatprep.subr.mxu0 %v367
    %1627 = vmatpush1.msra.mxu0 %v366
    %1628 = vmatprep.subr.mxu0 %v364
    %1629 = vmatpush1.msra.mxu0 %v363
    %1630 = vmatprep.subr.mxu0 %v361
    %1631 = vmatpush1.msra.mxu0 %v360
    %1632 = vmatprep.subr.mxu0 %v358
    %1633 = vmatpush1.msra.mxu0 %v357
    %1634 = vmatprep.subr.mxu0 0.0
    %1635 = vmatpush2.msra.mxu0 0.0
    %1636 = vmatprep.subr.mxu0 0.0
    %1637 = vmatpush2.msra.mxu0 0.0
    %1638 = vmatprep.subr.mxu0 0.0
    %1639 = vmatpush2.msra.mxu0 0.0
    %1640 = vmatprep.subr.mxu0 0.0
    %1641 = vmatpush2.msra.mxu0 0.0
    %1642 = vmatprep.subr.mxu0 0.0
    %1643 = vmatpush2.msra.mxu0 0.0
    %1644 = vmatprep.subr.mxu0 0.0
    %1645 = vmatpush2.msra.mxu0 0.0
    %1646 = vmatprep.subr.mxu0 0.0
    %1647 = vmatpush2.msra.mxu0 0.0
    %1648 = vmatprep.subr.mxu0 0.0
    %1649 = vmatpush2.msra.mxu0 0.0
    %1650 = vmatprep.subr.mxu0 0.0
    %1651 = vmatpush2.msra.mxu0 0.0
    %1652 = vmatprep.subr.mxu0 0.0
    %1653 = vmatpush2.msra.mxu0 0.0
    %1654 = vmatprep.subr.mxu0 0.0
    %1655 = vmatpush2.msra.mxu0 0.0
    %1656 = vmatprep.subr.mxu0 0.0
    %1657 = vmatpush2.msra.mxu0 0.0
    %1658 = vmatprep.subr.mxu0 0.0
    %1659 = vmatpush2.msra.mxu0 0.0
    %1660 = vmatprep.subr.mxu0 0.0
    %1661 = vmatpush2.msra.mxu0 0.0
    %1662 = vmatprep.subr.mxu0 0.0
    %1663 = vmatpush2.msra.mxu0 0.0
    %1664 = vmatprep.subr.mxu0 0.0
    %1665 = vmatpush2.msra.mxu0 0.0
    %1666 = vmatprep.mubr.f32.mxu0 0.0
    %1667 = vmatmul.mubr.f32.gmra.mxu0 %v1595
    %v1668 = vpop.f32.mrf.mxu0
    %v1669 = vadd.f32 0.0, %v1668
    %v1670 = vpop.f32.mrf.mxu0
    %v1671 = vadd.f32 0.0, %v1670
    %1672 = vdwg.mxu0
    %1673 = vmatprep.subr.mxu0 0.0
    %1674 = vmatpush1.msra.mxu0 %v404
    %1675 = vmatprep.subr.mxu0 0.0
    %1676 = vmatpush1.msra.mxu0 %v401
    %1677 = vmatprep.subr.mxu0 0.0
    %1678 = vmatpush1.msra.mxu0 %v398
    %1679 = vmatprep.subr.mxu0 0.0
    %1680 = vmatpush1.msra.mxu0 %v395
    %1681 = vmatprep.subr.mxu0 0.0
    %1682 = vmatpush1.msra.mxu0 %v392
    %1683 = vmatprep.subr.mxu0 0.0
    %1684 = vmatpush1.msra.mxu0 %v389
    %1685 = vmatprep.subr.mxu0 0.0
    %1686 = vmatpush1.msra.mxu0 %v386
    %1687 = vmatprep.subr.mxu0 0.0
    %1688 = vmatpush1.msra.mxu0 %v383
    %1689 = vmatprep.subr.mxu0 0.0
    %1690 = vmatpush1.msra.mxu0 %v380
    %1691 = vmatprep.subr.mxu0 0.0
    %1692 = vmatpush1.msra.mxu0 %v377
    %1693 = vmatprep.subr.mxu0 0.0
    %1694 = vmatpush1.msra.mxu0 %v374
    %1695 = vmatprep.subr.mxu0 0.0
    %1696 = vmatpush1.msra.mxu0 %v371
    %1697 = vmatprep.subr.mxu0 0.0
    %1698 = vmatpush1.msra.mxu0 %v368
    %1699 = vmatprep.subr.mxu0 0.0
    %1700 = vmatpush1.msra.mxu0 %v365
    %1701 = vmatprep.subr.mxu0 0.0
    %1702 = vmatpush1.msra.mxu0 %v362
    %1703 = vmatprep.subr.mxu0 0.0
    %1704 = vmatpush1.msra.mxu0 %v359
    %1705 = vmatprep.subr.mxu0 0.0
    %1706 = vmatpush2.msra.mxu0 0.0
    %1707 = vmatprep.subr.mxu0 0.0
    %1708 = vmatpush2.msra.mxu0 0.0
    %1709 = vmatprep.subr.mxu0 0.0
    %1710 = vmatpush2.msra.mxu0 0.0
    %1711 = vmatprep.subr.mxu0 0.0
    %1712 = vmatpush2.msra.mxu0 0.0
    %1713 = vmatprep.subr.mxu0 0.0
    %1714 = vmatpush2.msra.mxu0 0.0
    %1715 = vmatprep.subr.mxu0 0.0
    %1716 = vmatpush2.msra.mxu0 0.0
    %1717 = vmatprep.subr.mxu0 0.0
    %1718 = vmatpush2.msra.mxu0 0.0
    %1719 = vmatprep.subr.mxu0 0.0
    %1720 = vmatpush2.msra.mxu0 0.0
    %1721 = vmatprep.subr.mxu0 0.0
    %1722 = vmatpush2.msra.mxu0 0.0
    %1723 = vmatprep.subr.mxu0 0.0
    %1724 = vmatpush2.msra.mxu0 0.0
    %1725 = vmatprep.subr.mxu0 0.0
    %1726 = vmatpush2.msra.mxu0 0.0
    %1727 = vmatprep.subr.mxu0 0.0
    %1728 = vmatpush2.msra.mxu0 0.0
    %1729 = vmatprep.subr.mxu0 0.0
    %1730 = vmatpush2.msra.mxu0 0.0
    %1731 = vmatprep.subr.mxu0 0.0
    %1732 = vmatpush2.msra.mxu0 0.0
    %1733 = vmatprep.subr.mxu0 0.0
    %1734 = vmatpush2.msra.mxu0 0.0
    %1735 = vmatprep.subr.mxu0 0.0
    %1736 = vmatpush2.msra.mxu0 0.0
    %1737 = vmatprep.mubr.f32.mxu0 0.0
    %1738 = vmatmul.mubr.f32.gmra.mxu0 %v1595
    %v1739 = vpop.f32.mrf.mxu0
    %v1740 = vadd.f32 0.0, %v1739
    %v1741 = vpop.f32.mrf.mxu0
    %1742 = vdwg.mxu0
    %v1743 = vadd.f32 %v1599, %v1669
    %v1744 = vxor.u32 %v1743, 2147483648
    %v1745 = vmul.f32 %v1744, 1.442695
    %v1746 = vpow.pop %v1745
    %v1747 = vadd.f32 %v1746, 1.0
    %v1748 = vrcp.pop %v1747
    %v1749 = vmul.f32 1.0, %v1748
    %v1750 = vadd.f32 %v1600, %v1671
    %v1751 = vxor.u32 %v1750, 2147483648
    %v1752 = vmul.f32 %v1751, 1.442695
    %v1753 = vpow.pop %v1752
    %v1754 = vadd.f32 %v1753, 1.0
    %v1755 = vrcp.pop %v1754
    %v1756 = vmul.f32 1.0, %v1755
    %v1757 = vadd.f32 %v1740, %v410
    %v1758 = vmul.f32 %v1749, %v1757
    %v1759 = vadd.f32 %v1601, %v1758
    %v1760 = vtanh.pop %v1759
    %v1761 = vsub.f32 1.0, %v1756
    %v1762 = vmul.f32 %v1761, %v1760
    %v1763 = vmul.f32 %v1756, %v1595
    %v1764 = vadd.f32 %v1762, %v1763
    %1765 = vst [vmem:[#allocation3] sm:$0xff] %v1764
    // Predicated region
    $region30: #{tpu_custom_call.1} parent=1 // pred_check
      %p1766 = pneg %p57
    $region31: #{tpu_custom_call.1} parent=1 // pred_check_branch
      %1768 = sbr.rel (%p1766) target = $region33
    $region32: #{tpu_custom_call.1} parent=1 // pred_region
      %1769 = vst [vmem:[#allocation7] sm:$0xff] %v1764
    $region33: #{tpu_custom_call.1} parent=1 // pred_fallthru
      _
    // Predicated region
    $region34: #{tpu_custom_call.1} parent=1 // pred_check
      _
    $region35: #{tpu_custom_call.1} parent=1 // pred_check_branch
      %1771 = sbr.rel (0) target = $region37
    $region36: #{tpu_custom_call.1} parent=1 // pred_region
      %s1773 = ssub.s32 128, 128
      %1774 = vsyncadd [#allocation6], %s1773
      %s1776 = sshll.u32 [#allocation7], 4
      %s1777 = int_to_ptr.vmem [resolvable:$true] %s1776
      %1779 = dma.vmem_to_hbm [thread:$0]  %s1777, 128, %s5, [#allocation6]
    $region37: #{tpu_custom_call.1} parent=1 // pred_fallthru
      _
    // Predicated region
    $region38: #{tpu_custom_call.1} parent=1 // pred_check
      _
    $region39: #{tpu_custom_call.1} parent=1 // pred_check_branch
      %1781 = sbr.rel (0) target = $region41
    $region40: #{tpu_custom_call.1} parent=1 // pred_region
      %1782 = dma.done [#allocation6], 128
    $region41: #{tpu_custom_call.1} parent=1 // pred_fallthru
      _
    %1783 = vsyncpa [#allocation5], 1
    %1784 = vsyncpa [#allocation6], 1

</llo_original>
